<compile_context>
chip_gen: v7x
topology: tpu7x:2x2x1
jax: 0.10.0
libtpu: 0.0.40
codegen_flags: <defaults>
</compile_context>

<pallas_src>
import functools

import jax
import jax.numpy as jnp
from jax import lax
from jax.experimental import pallas as pl
from jax.experimental.pallas import tpu as pltpu


def _fused_lstm2_kernel(gx_first_ref, gx_ref, w_ref, b1_ref,
                        out_ref, hlast_ref,
                        h0, c0, h1, c1,
                        *, seq_len, t_blk, hidden, group, n_groups, unroll):
    """Both LSTM layers, skewed by one step, one time block per grid step."""
    H = hidden
    tb = pl.program_id(1)                       # time-block index (serial axis)

    # ---- hoisted loop invariants ------------------------------------------------
    # lane-constant gate scale: 0.5 on i/f/o lanes, 1.0 on g lanes
    lane = lax.broadcasted_iota(jnp.int32, (1, 4 * H), 1)
    sv = jnp.where((lane >= 2 * H) & (lane < 3 * H), 1.0, 0.5).astype(jnp.float32)
    sv_c = 1.0 - sv
    b1 = b1_ref[...]                            # (1, 4H) f32, layer-1 bias

    def cell(gates, c_prev):
        # gates: (B, 4H) f32 with bias already folded in.
        # sigmoid(x) = 0.5*tanh(0.5x)+0.5 ; one full-width tanh covers all 4 gates.
        t = jnp.tanh(gates * sv)
        a = t * sv + sv_c                       # i/f/o -> sigmoid, g -> tanh
        c_new = a[:, H:2 * H] * c_prev + a[:, 0:H] * a[:, 2 * H:3 * H]
        h_new = a[:, 3 * H:4 * H] * jnp.tanh(c_new)
        return h_new, c_new

    # ---- block 0: init states and run layer-0 step 0 (h0(-1)=0 -> no matmul) -----
    @pl.when(tb == 0)
    def _():
        h0_0, c0_0 = cell(gx_first_ref[...], jnp.zeros(c0.shape, c0.dtype))
        h0[...] = h0_0.astype(h0.dtype)
        c0[...] = c0_0
        h1[...] = jnp.zeros(h1.shape, h1.dtype)
        c1[...] = jnp.zeros(c1.shape, c1.dtype)

    t0 = tb * t_blk

    # ---- skewed fused loop: one group = `group` timesteps = one 128-lane store ---
    def group_body(j, carry):
        h0v, c0v, h1v, c1v = carry              # h bf16 (matmul operand), c f32
        outs = []
        for u in range(group):                  # static inner unroll
            sl = j * group + u                  # local output slot
            s = t0 + sl                         # global step produced by layer-1

            hcat = jnp.concatenate([h0v, h1v], axis=-1)          # (B, 2H) bf16
            hh = jnp.dot(hcat, w_ref[...],
                         preferred_element_type=jnp.float32)     # (B, 8H) f32

            # layer 1, step s: input h0(s), recurrent h1(s-1)
            h1_new, c1v = cell(hh[:, 4 * H:8 * H] + b1, c1v)
            # layer 0, step s+1: streamed gates_x (bias folded), recurrent h0(s)
            h0_new, c0v = cell(gx_ref[sl] + hh[:, 0:4 * H], c0v)

            # capture final hidden states at the true last step (tail-safe)
            @pl.when(s == seq_len - 1)
            def _():
                hlast_ref[0] = h0v.astype(hlast_ref.dtype)       # h0(T-1)
                hlast_ref[1] = h1_new.astype(hlast_ref.dtype)    # h1(T-1)

            h0v = h0_new.astype(jnp.bfloat16)
            h1v = h1_new.astype(jnp.bfloat16)
            outs.append(h1_new)

        # one lane-dense (B, group*H >= 128) store per group
        out_ref[j] = jnp.concatenate(outs, axis=-1).astype(out_ref.dtype)
        return h0v, c0v, h1v, c1v

    carry0 = (h0[...], c0[...], h1[...], c1[...])
    h0f, c0f, h1f, c1f = lax.fori_loop(0, n_groups, group_body, carry0,
                                       unroll=unroll)

    # persist state across time blocks
    h0[...] = h0f
    c0[...] = c0f
    h1[...] = h1f
    c1[...] = c1f


def custom_lstm_forward(x, params, *, batch_block=None):
    """Forward pass matching CustomLSTM.forward (num_layers=2, eval mode).

    x: (B, T, input_dim) or (B, 1, T, input_dim).
    params: list of 2 dicts with w_ih (4H,D), w_hh (4H,H), b_ih (4H,), b_hh (4H,).
    Returns (output (B, T, H), hidden (2, B, H)).
    """
    if x.ndim == 4 and x.shape[1] == 1:
        x = jnp.squeeze(x, axis=1)
    assert len(params) == 2, "fused kernel implements the module default num_layers=2"

    B, T, D = x.shape
    H = params[0]["w_hh"].shape[1]

    B_pad = ((B + 7) // 8) * 8                  # full f32 sublane group
    # On v7x set batch_block = B_pad // 2 (when B_pad >= 16) to split the parallel
    # batch axis across the 2 TensorCores; keep = B_pad on single-TC chips.
    b_blk = B_pad if batch_block is None else batch_block
    assert B_pad % b_blk == 0
    n_bb = B_pad // b_blk

    # Lane-dense output chunking: pack `group` timesteps (group*H lanes) per store.
    group = (128 // H) if (H < 128 and 128 % H == 0) else 1
    chunk = group * H
    t_blk = min(64, ((T + group - 1) // group) * group)
    t_blk = max(group, (t_blk // group) * group)
    n_tb = (T + t_blk - 1) // t_blk
    T_pad = n_tb * t_blk
    n_groups = t_blk // group
    unroll = max(1, min(n_groups, 8 // group if group < 8 else 1))

    x_t = jnp.transpose(x, (1, 0, 2)).astype(jnp.float32)   # time-major (T, B, D)
    if B_pad != B:
        x_t = jnp.pad(x_t, ((0, 0), (0, B_pad - B), (0, 0)))

    # ---- layer-0 input projection hoisted out of the recurrence: one big GEMM ----
    w_ih0_t = jnp.transpose(params[0]["w_ih"]).astype(jnp.bfloat16)       # (D, 4H)
    bias0 = (params[0]["b_ih"] + params[0]["b_hh"]).astype(jnp.float32)
    gx0 = jnp.dot(x_t.reshape(T * B_pad, D).astype(jnp.bfloat16), w_ih0_t,
                  preferred_element_type=jnp.float32) + bias0
    gx0 = gx0.reshape(T, B_pad, 4 * H)

    # Skewed streaming: grid step covering output steps t0..t0+t_blk-1 needs the
    # layer-0 gates of steps t0+1..t0+t_blk, so drop row 0 (fed separately, resident)
    # and pad the tail with zeros (garbage steps never reach the captured hidden state).
    gx_first = gx0[0]                                                     # (B_pad, 4H)
    gx_rest = jnp.pad(gx0[1:], ((0, T_pad - (T - 1)), (0, 0), (0, 0)))    # (T_pad, B_pad, 4H)

    # ---- combined recurrent weight: [h0, h1] @ W -> [l0 recurrent gates | l1 gates]
    w_hh0_t = jnp.transpose(params[0]["w_hh"]).astype(jnp.bfloat16)       # (H, 4H)
    w_ih1_t = jnp.transpose(params[1]["w_ih"]).astype(jnp.bfloat16)       # (H, 4H)
    w_hh1_t = jnp.transpose(params[1]["w_hh"]).astype(jnp.bfloat16)       # (H, 4H)
    zeros = jnp.zeros((H, 4 * H), jnp.bfloat16)
    w_comb = jnp.concatenate(
        [jnp.concatenate([w_hh0_t, w_ih1_t], axis=1),
         jnp.concatenate([zeros, w_hh1_t], axis=1)], axis=0)              # (2H, 8H)

    bias1 = (params[1]["b_ih"] + params[1]["b_hh"]).astype(jnp.float32).reshape(1, 4 * H)

    kernel = functools.partial(_fused_lstm2_kernel, seq_len=T, t_blk=t_blk,
                               hidden=H, group=group, n_groups=n_groups,
                               unroll=unroll)

    # Explicit VMEM budget (headroom x4, capped at 64 MiB so it stays v7x-safe).
    vmem_need = (2 * t_blk * b_blk * 4 * H * 4            # gates_x block, double-buffered
                 + 2 * n_groups * b_blk * chunk * 4       # output block, double-buffered
                 + 2 * H * 8 * H * 2 + 4 * H * 4          # resident weights + bias
                 + b_blk * 4 * H * 4                      # gx_first
                 + 2 * b_blk * H * 4 + 4 * b_blk * H * 4)  # hlast + state scratch
    vmem_limit = int(min(64 * 2 ** 20, max(4 * vmem_need, 16 * 2 ** 20)))

    out, h_last = pl.pallas_call(
        kernel,
        out_shape=(jax.ShapeDtypeStruct((n_tb * n_groups, B_pad, chunk), x.dtype),
                   jax.ShapeDtypeStruct((2, B_pad, H), x.dtype)),
        grid_spec=pltpu.PrefetchScalarGridSpec(
            num_scalar_prefetch=0,
            grid=(n_bb, n_tb),                            # (batch blocks, time blocks)
            in_specs=[
                pl.BlockSpec((b_blk, 4 * H), lambda bb, tb: (bb, 0)),          # step-0 gates
                pl.BlockSpec((t_blk, b_blk, 4 * H), lambda bb, tb: (tb, bb, 0)),  # gates_x
                pl.BlockSpec((2 * H, 8 * H), lambda bb, tb: (0, 0)),           # W_comb
                pl.BlockSpec((1, 4 * H), lambda bb, tb: (0, 0)),               # layer-1 bias
            ],
            out_specs=[
                pl.BlockSpec((n_groups, b_blk, chunk), lambda bb, tb: (tb, bb, 0)),
                pl.BlockSpec((2, b_blk, H), lambda bb, tb: (0, bb, 0)),
            ],
            scratch_shapes=[pltpu.VMEM((b_blk, H), jnp.bfloat16),   # h0 (matmul dtype)
                            pltpu.VMEM((b_blk, H), jnp.float32),    # c0
                            pltpu.VMEM((b_blk, H), jnp.bfloat16),   # h1
                            pltpu.VMEM((b_blk, H), jnp.float32)],   # c1
        ),
        compiler_params=pltpu.CompilerParams(
            dimension_semantics=("parallel", "arbitrary"),
            vmem_limit_bytes=vmem_limit),
    )(gx_first, gx_rest, w_comb, bias1)

    # Un-pack the lane-dense chunks: [q, b, u*H+h] = h1 at timestep q*group+u.
    out = out.reshape(T_pad // group, B_pad, group, H)
    out = jnp.transpose(out, (1, 0, 2, 3)).reshape(B_pad, T_pad, H)
    output = out[:B, :T, :]                               # batch-first (B, T, H)
    hidden = h_last[:, :B, :]                             # (num_layers, B, H)
    return output, hidden


def _reference_lstm(x, params):
    """Pure-JAX reference using the same bf16-weight / f32-accumulate math."""
    if x.ndim == 4 and x.shape[1] == 1:
        x = jnp.squeeze(x, axis=1)
    B, _, _ = x.shape
    h_in = jnp.transpose(x, (1, 0, 2))    # (T, B, D)
    last = []
    for layer in params:
        H = layer["w_hh"].shape[1]
        w_ih_t = jnp.transpose(layer["w_ih"]).astype(jnp.bfloat16)
        w_hh_t = jnp.transpose(layer["w_hh"]).astype(jnp.bfloat16)
        bias = (layer["b_ih"] + layer["b_hh"]).astype(jnp.float32)

        def step(carry, x_t, w_ih_t=w_ih_t, w_hh_t=w_hh_t, bias=bias, H=H):
            h, c = carry
            gates = (jnp.dot(x_t.astype(jnp.bfloat16), w_ih_t,
                             preferred_element_type=jnp.float32)
                     + jnp.dot(h.astype(jnp.bfloat16), w_hh_t,
                               preferred_element_type=jnp.float32)
                     + bias)
            i = jax.nn.sigmoid(gates[:, 0:H])
            f = jax.nn.sigmoid(gates[:, H:2 * H])
            g = jnp.tanh(gates[:, 2 * H:3 * H])
            o = jax.nn.sigmoid(gates[:, 3 * H:4 * H])
            c = f * c + i * g
            h = o * jnp.tanh(c)
            return (h, c), h

        init = (jnp.zeros((B, H), jnp.float32), jnp.zeros((B, H), jnp.float32))
        (h_T, _), hs = lax.scan(step, init, h_in)
        h_in = hs
        last.append(h_T)
    return jnp.transpose(h_in, (1, 0, 2)), jnp.stack(last, axis=0)


def init_lstm_params(key, input_dim, hidden_dim, num_layers):
    """Deterministic init mirroring nn.LSTM parameter shapes (uniform +-1/sqrt(H))."""
    params = []
    bound = 1.0 / float(hidden_dim) ** 0.5
    for layer in range(num_layers):
        d_in = input_dim if layer == 0 else hidden_dim
        key, k1, k2, k3, k4 = jax.random.split(key, 5)
        params.append({
            "w_ih": jax.random.uniform(k1, (4 * hidden_dim, d_in),
                                       jnp.float32, -bound, bound),
            "w_hh": jax.random.uniform(k2, (4 * hidden_dim, hidden_dim),
                                       jnp.float32, -bound, bound),
            "b_ih": jax.random.uniform(k3, (4 * hidden_dim,),
                                       jnp.float32, -bound, bound),
            "b_hh": jax.random.uniform(k4, (4 * hidden_dim,),
                                       jnp.float32, -bound, bound),
        })
    return params


if __name__ == "__main__":
    B, T, INPUT_DIM, HIDDEN_DIM, NUM_LAYERS = 2, 8, 16, 32, 2

    key = jax.random.PRNGKey(0)
    key, xk = jax.random.split(key)
    x = jax.random.normal(xk, (B, T, INPUT_DIM), jnp.float32)

    params = init_lstm_params(key, INPUT_DIM, HIDDEN_DIM, NUM_LAYERS)

    output, hidden = custom_lstm_forward(x, params)
    output = jax.block_until_ready(output)
    hidden = jax.block_until_ready(hidden)

    assert output.shape == (B, T, HIDDEN_DIM), output.shape
    assert hidden.shape == (NUM_LAYERS, B, HIDDEN_DIM), hidden.shape
    assert bool(jnp.all(jnp.isfinite(output))) and bool(jnp.all(jnp.isfinite(hidden)))

    ref_out, ref_hid = _reference_lstm(x, params)
    assert bool(jnp.allclose(output, ref_out, atol=2e-3, rtol=2e-3)), \
        float(jnp.max(jnp.abs(output - ref_out)))
    assert bool(jnp.allclose(hidden, ref_hid, atol=2e-3, rtol=2e-3)), \
        float(jnp.max(jnp.abs(hidden - ref_hid)))

    print("KERNEL_OK")
</pallas_src>

<mosaic_0001>
module attributes {stable_mosaic.version = 11 : i64} {
  func.func @_fused_lstm2_kernel(%arg0: i32, %arg1: i32, %arg2: memref<8x128xf32, #tpu.memory_space<vmem>>, %arg3: memref<8x8x128xf32, #tpu.memory_space<vmem>>, %arg4: memref<64x256xbf16, #tpu.memory_space<vmem>>, %arg5: memref<1x128xf32, #tpu.memory_space<vmem>>, %arg6: memref<2x8x128xf32, #tpu.memory_space<vmem>>, %arg7: memref<2x8x32xf32, #tpu.memory_space<vmem>>, %arg8: memref<8x32xbf16, #tpu.memory_space<vmem>>, %arg9: memref<8x32xf32, #tpu.memory_space<vmem>>, %arg10: memref<8x32xbf16, #tpu.memory_space<vmem>>, %arg11: memref<8x32xf32, #tpu.memory_space<vmem>>) attributes {dimension_semantics = [#tpu.dimension_semantics<parallel>, #tpu.dimension_semantics<arbitrary>], iteration_bounds = array<i64: 1, 1>, scalar_prefetch = 0 : i64, scratch_operands = 4 : i64, tpu.core_type = #tpu.core_type<tc>, window_params = [{transform_indices = @transform_0, window_bounds = array<i64: 8, 128>}, {transform_indices = @transform_1, window_bounds = array<i64: 8, 8, 128>}, {pipeline_mode = #tpu.pipeline_mode<synchronous>, transform_indices = @transform_2, window_bounds = array<i64: 64, 256>}, {pipeline_mode = #tpu.pipeline_mode<synchronous>, transform_indices = @transform_3, window_bounds = array<i64: 1, 128>}, {transform_indices = @transform_4, window_bounds = array<i64: 2, 8, 128>}, {transform_indices = @transform_5, window_bounds = array<i64: 2, 8, 32>}]} {
    %0 = tpu.iota {dimensions = array<i32: 1>} : vector<1x128xi32>
    %c64_i32 = arith.constant 64 : i32
    %1 = vector.broadcast %c64_i32 : i32 to vector<1x128xi32>
    %2 = arith.cmpi sge, %0, %1 : vector<1x128xi32>
    %c96_i32 = arith.constant 96 : i32
    %3 = vector.broadcast %c96_i32 : i32 to vector<1x128xi32>
    %4 = arith.cmpi slt, %0, %3 : vector<1x128xi32>
    %5 = arith.andi %2, %4 : vector<1x128xi1>
    %cst = arith.constant 1.000000e+00 : f32
    %cst_0 = arith.constant 5.000000e-01 : f32
    %6 = vector.broadcast %cst : f32 to vector<1x128xf32>
    %7 = vector.broadcast %cst_0 : f32 to vector<1x128xf32>
    %8 = arith.select %5, %6, %7 : vector<1x128xi1>, vector<1x128xf32>
    %cst_1 = arith.constant 1.000000e+00 : f32
    %9 = vector.broadcast %cst_1 : f32 to vector<1x128xf32>
    %10 = arith.subf %9, %8 : vector<1x128xf32>
    %c0 = arith.constant 0 : index
    %c0_2 = arith.constant 0 : index
    %11 = vector.load %arg5[%c0, %c0_2] : memref<1x128xf32, #tpu.memory_space<vmem>>, vector<1x128xf32>
    %c0_i32 = arith.constant 0 : i32
    %12 = arith.cmpi eq, %arg1, %c0_i32 : i32
    %13 = arith.extui %12 : i1 to i32
    %c0_i32_3 = arith.constant 0 : i32
    %14 = arith.cmpi ne, %13, %c0_i32_3 : i32
    scf.if %14 {
      %c0_94 = arith.constant 0 : index
      %c0_95 = arith.constant 0 : index
      %442 = vector.load %arg2[%c0_94, %c0_95] : memref<8x128xf32, #tpu.memory_space<vmem>>, vector<8x128xf32>
      %cst_96 = arith.constant 0.000000e+00 : f32
      %443 = vector.broadcast %cst_96 : f32 to vector<8x32xf32>
      %444 = vector.broadcast %8 : vector<1x128xf32> to vector<8x128xf32>
      %445 = arith.mulf %442, %444 : vector<8x128xf32>
      %446 = math.tanh %445 : vector<8x128xf32>
      %447 = vector.broadcast %8 : vector<1x128xf32> to vector<8x128xf32>
      %448 = arith.mulf %446, %447 : vector<8x128xf32>
      %449 = vector.broadcast %10 : vector<1x128xf32> to vector<8x128xf32>
      %450 = arith.addf %448, %449 : vector<8x128xf32>
      %451 = vector.extract_strided_slice %450 {offsets = [0, 32], sizes = [8, 32], strides = [1, 1]} : vector<8x128xf32> to vector<8x32xf32>
      %452 = arith.mulf %451, %443 : vector<8x32xf32>
      %453 = vector.extract_strided_slice %450 {offsets = [0, 0], sizes = [8, 32], strides = [1, 1]} : vector<8x128xf32> to vector<8x32xf32>
      %454 = vector.extract_strided_slice %450 {offsets = [0, 64], sizes = [8, 32], strides = [1, 1]} : vector<8x128xf32> to vector<8x32xf32>
      %455 = arith.mulf %453, %454 : vector<8x32xf32>
      %456 = arith.addf %452, %455 : vector<8x32xf32>
      %457 = vector.extract_strided_slice %450 {offsets = [0, 96], sizes = [8, 32], strides = [1, 1]} : vector<8x128xf32> to vector<8x32xf32>
      %458 = math.tanh %456 : vector<8x32xf32>
      %459 = arith.mulf %457, %458 : vector<8x32xf32>
      %460 = arith.truncf %459 : vector<8x32xf32> to vector<8x32xbf16>
      %c0_97 = arith.constant 0 : index
      %c0_98 = arith.constant 0 : index
      %461 = vector.load %arg8[%c0_97, %c0_98] : memref<8x32xbf16, #tpu.memory_space<vmem>>, vector<8x32xbf16>
      tpu.vector_store %arg8[%c0_97, %c0_98], %460 {strides = array<i32>} : memref<8x32xbf16, #tpu.memory_space<vmem>>, vector<8x32xbf16>,
      %c0_99 = arith.constant 0 : index
      %c0_100 = arith.constant 0 : index
      %462 = vector.load %arg9[%c0_99, %c0_100] : memref<8x32xf32, #tpu.memory_space<vmem>>, vector<8x32xf32>
      tpu.vector_store %arg9[%c0_99, %c0_100], %456 {strides = array<i32>} : memref<8x32xf32, #tpu.memory_space<vmem>>, vector<8x32xf32>,
      %cst_101 = arith.constant 0.000000e+00 : bf16
      %463 = vector.broadcast %cst_101 : bf16 to vector<8x32xbf16>
      %c0_102 = arith.constant 0 : index
      %c0_103 = arith.constant 0 : index
      %464 = vector.load %arg10[%c0_102, %c0_103] : memref<8x32xbf16, #tpu.memory_space<vmem>>, vector<8x32xbf16>
      tpu.vector_store %arg10[%c0_102, %c0_103], %463 {strides = array<i32>} : memref<8x32xbf16, #tpu.memory_space<vmem>>, vector<8x32xbf16>,
      %cst_104 = arith.constant 0.000000e+00 : f32
      %465 = vector.broadcast %cst_104 : f32 to vector<8x32xf32>
      %c0_105 = arith.constant 0 : index
      %c0_106 = arith.constant 0 : index
      %466 = vector.load %arg11[%c0_105, %c0_106] : memref<8x32xf32, #tpu.memory_space<vmem>>, vector<8x32xf32>
      tpu.vector_store %arg11[%c0_105, %c0_106], %465 {strides = array<i32>} : memref<8x32xf32, #tpu.memory_space<vmem>>, vector<8x32xf32>,
    } else {
    }
    %c8_i32 = arith.constant 8 : i32
    %15 = arith.muli %arg1, %c8_i32 : i32
    %c0_4 = arith.constant 0 : index
    %c0_5 = arith.constant 0 : index
    %16 = vector.load %arg8[%c0_4, %c0_5] : memref<8x32xbf16, #tpu.memory_space<vmem>>, vector<8x32xbf16>
    %c0_6 = arith.constant 0 : index
    %c0_7 = arith.constant 0 : index
    %17 = vector.load %arg9[%c0_6, %c0_7] : memref<8x32xf32, #tpu.memory_space<vmem>>, vector<8x32xf32>
    %c0_8 = arith.constant 0 : index
    %c0_9 = arith.constant 0 : index
    %18 = vector.load %arg10[%c0_8, %c0_9] : memref<8x32xbf16, #tpu.memory_space<vmem>>, vector<8x32xbf16>
    %c0_10 = arith.constant 0 : index
    %c0_11 = arith.constant 0 : index
    %19 = vector.load %arg11[%c0_10, %c0_11] : memref<8x32xf32, #tpu.memory_space<vmem>>, vector<8x32xf32>
    %c0_i32_12 = arith.constant 0 : i32
    %c4_i32 = arith.constant 4 : i32
    %20 = arith.muli %c0_i32_12, %c4_i32 : i32
    %c0_i32_13 = arith.constant 0 : i32
    %21 = arith.addi %20, %c0_i32_13 : i32
    %22 = arith.addi %15, %21 : i32
    %23 = tpu.concatenate %16, %18 in 1 : vector<8x32xbf16>, vector<8x32xbf16> -> vector<8x64xbf16>
    %c0_14 = arith.constant 0 : index
    %c0_15 = arith.constant 0 : index
    %24 = vector.load %arg4[%c0_14, %c0_15] : memref<64x256xbf16, #tpu.memory_space<vmem>>, vector<64x256xbf16>
    %cst_16 = arith.constant dense<0.000000e+00> : vector<8x256xf32>
    %25 = tpu.matmul %23, %24, %cst_16 {dimension_numbers = #tpu.dot_dimension_numbers<[1], [0], [0], [1], [0, 0, 1, 1], [], []>} : vector<8x64xbf16>, vector<64x256xbf16>, vector<8x256xf32> -> vector<8x256xf32>
    %26 = vector.extract_strided_slice %25 {offsets = [0, 128], sizes = [8, 128], strides = [1, 1]} : vector<8x256xf32> to vector<8x128xf32>
    %27 = vector.broadcast %11 : vector<1x128xf32> to vector<8x128xf32>
    %28 = arith.addf %26, %27 : vector<8x128xf32>
    %29 = vector.broadcast %8 : vector<1x128xf32> to vector<8x128xf32>
    %30 = arith.mulf %28, %29 : vector<8x128xf32>
    %31 = math.tanh %30 : vector<8x128xf32>
    %32 = vector.broadcast %8 : vector<1x128xf32> to vector<8x128xf32>
    %33 = arith.mulf %31, %32 : vector<8x128xf32>
    %34 = vector.broadcast %10 : vector<1x128xf32> to vector<8x128xf32>
    %35 = arith.addf %33, %34 : vector<8x128xf32>
    %36 = vector.extract_strided_slice %35 {offsets = [0, 32], sizes = [8, 32], strides = [1, 1]} : vector<8x128xf32> to vector<8x32xf32>
    %37 = arith.mulf %36, %19 : vector<8x32xf32>
    %38 = vector.extract_strided_slice %35 {offsets = [0, 0], sizes = [8, 32], strides = [1, 1]} : vector<8x128xf32> to vector<8x32xf32>
    %39 = vector.extract_strided_slice %35 {offsets = [0, 64], sizes = [8, 32], strides = [1, 1]} : vector<8x128xf32> to vector<8x32xf32>
    %40 = arith.mulf %38, %39 : vector<8x32xf32>
    %41 = arith.addf %37, %40 : vector<8x32xf32>
    %42 = vector.extract_strided_slice %35 {offsets = [0, 96], sizes = [8, 32], strides = [1, 1]} : vector<8x128xf32> to vector<8x32xf32>
    %43 = math.tanh %41 : vector<8x32xf32>
    %44 = arith.mulf %42, %43 : vector<8x32xf32>
    %45 = arith.index_cast %21 : i32 to index
    %c0_17 = arith.constant 0 : index
    %c0_18 = arith.constant 0 : index
    %46 = vector.load %arg3[%45, %c0_17, %c0_18] : memref<8x8x128xf32, #tpu.memory_space<vmem>>, vector<1x8x128xf32>
    %47 = vector.shape_cast %46 : vector<1x8x128xf32> to vector<8x128xf32>
    %48 = vector.extract_strided_slice %25 {offsets = [0, 0], sizes = [8, 128], strides = [1, 1]} : vector<8x256xf32> to vector<8x128xf32>
    %49 = arith.addf %47, %48 : vector<8x128xf32>
    %50 = vector.broadcast %8 : vector<1x128xf32> to vector<8x128xf32>
    %51 = arith.mulf %49, %50 : vector<8x128xf32>
    %52 = math.tanh %51 : vector<8x128xf32>
    %53 = vector.broadcast %8 : vector<1x128xf32> to vector<8x128xf32>
    %54 = arith.mulf %52, %53 : vector<8x128xf32>
    %55 = vector.broadcast %10 : vector<1x128xf32> to vector<8x128xf32>
    %56 = arith.addf %54, %55 : vector<8x128xf32>
    %57 = vector.extract_strided_slice %56 {offsets = [0, 32], sizes = [8, 32], strides = [1, 1]} : vector<8x128xf32> to vector<8x32xf32>
    %58 = arith.mulf %57, %17 : vector<8x32xf32>
    %59 = vector.extract_strided_slice %56 {offsets = [0, 0], sizes = [8, 32], strides = [1, 1]} : vector<8x128xf32> to vector<8x32xf32>
    %60 = vector.extract_strided_slice %56 {offsets = [0, 64], sizes = [8, 32], strides = [1, 1]} : vector<8x128xf32> to vector<8x32xf32>
    %61 = arith.mulf %59, %60 : vector<8x32xf32>
    %62 = arith.addf %58, %61 : vector<8x32xf32>
    %63 = vector.extract_strided_slice %56 {offsets = [0, 96], sizes = [8, 32], strides = [1, 1]} : vector<8x128xf32> to vector<8x32xf32>
    %64 = math.tanh %62 : vector<8x32xf32>
    %65 = arith.mulf %63, %64 : vector<8x32xf32>
    %c7_i32 = arith.constant 7 : i32
    %66 = arith.cmpi eq, %22, %c7_i32 : i32
    %67 = arith.extui %66 : i1 to i32
    %c0_i32_19 = arith.constant 0 : i32
    %68 = arith.cmpi ne, %67, %c0_i32_19 : i32
    scf.if %68 {
      %442 = arith.extf %16 : vector<8x32xbf16> to vector<8x32xf32>
      %c0_94 = arith.constant 0 : index
      %c0_95 = arith.constant 0 : index
      %c0_96 = arith.constant 0 : index
      %443 = vector.load %arg7[%c0_94, %c0_95, %c0_96] : memref<2x8x32xf32, #tpu.memory_space<vmem>>, vector<1x8x32xf32>
      %444 = vector.shape_cast %443 : vector<1x8x32xf32> to vector<8x32xf32>
      %445 = vector.shape_cast %442 : vector<8x32xf32> to vector<1x8x32xf32>
      tpu.vector_store %arg7[%c0_94, %c0_95, %c0_96], %445 {strides = array<i32>} : memref<2x8x32xf32, #tpu.memory_space<vmem>>, vector<1x8x32xf32>,
      %c1 = arith.constant 1 : index
      %c0_97 = arith.constant 0 : index
      %c0_98 = arith.constant 0 : index
      %446 = vector.load %arg7[%c1, %c0_97, %c0_98] : memref<2x8x32xf32, #tpu.memory_space<vmem>>, vector<1x8x32xf32>
      %447 = vector.shape_cast %446 : vector<1x8x32xf32> to vector<8x32xf32>
      %448 = vector.shape_cast %44 : vector<8x32xf32> to vector<1x8x32xf32>
      tpu.vector_store %arg7[%c1, %c0_97, %c0_98], %448 {strides = array<i32>} : memref<2x8x32xf32, #tpu.memory_space<vmem>>, vector<1x8x32xf32>,
    } else {
    }
    %69 = arith.truncf %65 : vector<8x32xf32> to vector<8x32xbf16>
    %70 = arith.truncf %44 : vector<8x32xf32> to vector<8x32xbf16>
    %c4_i32_20 = arith.constant 4 : i32
    %71 = arith.muli %c0_i32_12, %c4_i32_20 : i32
    %c1_i32 = arith.constant 1 : i32
    %72 = arith.addi %71, %c1_i32 : i32
    %73 = arith.addi %15, %72 : i32
    %74 = tpu.concatenate %69, %70 in 1 : vector<8x32xbf16>, vector<8x32xbf16> -> vector<8x64xbf16>
    %c0_21 = arith.constant 0 : index
    %c0_22 = arith.constant 0 : index
    %75 = vector.load %arg4[%c0_21, %c0_22] : memref<64x256xbf16, #tpu.memory_space<vmem>>, vector<64x256xbf16>
    %cst_23 = arith.constant dense<0.000000e+00> : vector<8x256xf32>
    %76 = tpu.matmul %74, %75, %cst_23 {dimension_numbers = #tpu.dot_dimension_numbers<[1], [0], [0], [1], [0, 0, 1, 1], [], []>} : vector<8x64xbf16>, vector<64x256xbf16>, vector<8x256xf32> -> vector<8x256xf32>
    %77 = vector.extract_strided_slice %76 {offsets = [0, 128], sizes = [8, 128], strides = [1, 1]} : vector<8x256xf32> to vector<8x128xf32>
    %78 = vector.broadcast %11 : vector<1x128xf32> to vector<8x128xf32>
    %79 = arith.addf %77, %78 : vector<8x128xf32>
    %80 = vector.broadcast %8 : vector<1x128xf32> to vector<8x128xf32>
    %81 = arith.mulf %79, %80 : vector<8x128xf32>
    %82 = math.tanh %81 : vector<8x128xf32>
    %83 = vector.broadcast %8 : vector<1x128xf32> to vector<8x128xf32>
    %84 = arith.mulf %82, %83 : vector<8x128xf32>
    %85 = vector.broadcast %10 : vector<1x128xf32> to vector<8x128xf32>
    %86 = arith.addf %84, %85 : vector<8x128xf32>
    %87 = vector.extract_strided_slice %86 {offsets = [0, 32], sizes = [8, 32], strides = [1, 1]} : vector<8x128xf32> to vector<8x32xf32>
    %88 = arith.mulf %87, %41 : vector<8x32xf32>
    %89 = vector.extract_strided_slice %86 {offsets = [0, 0], sizes = [8, 32], strides = [1, 1]} : vector<8x128xf32> to vector<8x32xf32>
    %90 = vector.extract_strided_slice %86 {offsets = [0, 64], sizes = [8, 32], strides = [1, 1]} : vector<8x128xf32> to vector<8x32xf32>
    %91 = arith.mulf %89, %90 : vector<8x32xf32>
    %92 = arith.addf %88, %91 : vector<8x32xf32>
    %93 = vector.extract_strided_slice %86 {offsets = [0, 96], sizes = [8, 32], strides = [1, 1]} : vector<8x128xf32> to vector<8x32xf32>
    %94 = math.tanh %92 : vector<8x32xf32>
    %95 = arith.mulf %93, %94 : vector<8x32xf32>
    %96 = arith.index_cast %72 : i32 to index
    %c0_24 = arith.constant 0 : index
    %c0_25 = arith.constant 0 : index
    %97 = vector.load %arg3[%96, %c0_24, %c0_25] : memref<8x8x128xf32, #tpu.memory_space<vmem>>, vector<1x8x128xf32>
    %98 = vector.shape_cast %97 : vector<1x8x128xf32> to vector<8x128xf32>
    %99 = vector.extract_strided_slice %76 {offsets = [0, 0], sizes = [8, 128], strides = [1, 1]} : vector<8x256xf32> to vector<8x128xf32>
    %100 = arith.addf %98, %99 : vector<8x128xf32>
    %101 = vector.broadcast %8 : vector<1x128xf32> to vector<8x128xf32>
    %102 = arith.mulf %100, %101 : vector<8x128xf32>
    %103 = math.tanh %102 : vector<8x128xf32>
    %104 = vector.broadcast %8 : vector<1x128xf32> to vector<8x128xf32>
    %105 = arith.mulf %103, %104 : vector<8x128xf32>
    %106 = vector.broadcast %10 : vector<1x128xf32> to vector<8x128xf32>
    %107 = arith.addf %105, %106 : vector<8x128xf32>
    %108 = vector.extract_strided_slice %107 {offsets = [0, 32], sizes = [8, 32], strides = [1, 1]} : vector<8x128xf32> to vector<8x32xf32>
    %109 = arith.mulf %108, %62 : vector<8x32xf32>
    %110 = vector.extract_strided_slice %107 {offsets = [0, 0], sizes = [8, 32], strides = [1, 1]} : vector<8x128xf32> to vector<8x32xf32>
    %111 = vector.extract_strided_slice %107 {offsets = [0, 64], sizes = [8, 32], strides = [1, 1]} : vector<8x128xf32> to vector<8x32xf32>
    %112 = arith.mulf %110, %111 : vector<8x32xf32>
    %113 = arith.addf %109, %112 : vector<8x32xf32>
    %114 = vector.extract_strided_slice %107 {offsets = [0, 96], sizes = [8, 32], strides = [1, 1]} : vector<8x128xf32> to vector<8x32xf32>
    %115 = math.tanh %113 : vector<8x32xf32>
    %116 = arith.mulf %114, %115 : vector<8x32xf32>
    %c7_i32_26 = arith.constant 7 : i32
    %117 = arith.cmpi eq, %73, %c7_i32_26 : i32
    %118 = arith.extui %117 : i1 to i32
    %c0_i32_27 = arith.constant 0 : i32
    %119 = arith.cmpi ne, %118, %c0_i32_27 : i32
    scf.if %119 {
      %442 = arith.extf %69 : vector<8x32xbf16> to vector<8x32xf32>
      %c0_94 = arith.constant 0 : index
      %c0_95 = arith.constant 0 : index
      %c0_96 = arith.constant 0 : index
      %443 = vector.load %arg7[%c0_94, %c0_95, %c0_96] : memref<2x8x32xf32, #tpu.memory_space<vmem>>, vector<1x8x32xf32>
      %444 = vector.shape_cast %443 : vector<1x8x32xf32> to vector<8x32xf32>
      %445 = vector.shape_cast %442 : vector<8x32xf32> to vector<1x8x32xf32>
      tpu.vector_store %arg7[%c0_94, %c0_95, %c0_96], %445 {strides = array<i32>} : memref<2x8x32xf32, #tpu.memory_space<vmem>>, vector<1x8x32xf32>,
      %c1 = arith.constant 1 : index
      %c0_97 = arith.constant 0 : index
      %c0_98 = arith.constant 0 : index
      %446 = vector.load %arg7[%c1, %c0_97, %c0_98] : memref<2x8x32xf32, #tpu.memory_space<vmem>>, vector<1x8x32xf32>
      %447 = vector.shape_cast %446 : vector<1x8x32xf32> to vector<8x32xf32>
      %448 = vector.shape_cast %95 : vector<8x32xf32> to vector<1x8x32xf32>
      tpu.vector_store %arg7[%c1, %c0_97, %c0_98], %448 {strides = array<i32>} : memref<2x8x32xf32, #tpu.memory_space<vmem>>, vector<1x8x32xf32>,
    } else {
    }
    %120 = arith.truncf %116 : vector<8x32xf32> to vector<8x32xbf16>
    %121 = arith.truncf %95 : vector<8x32xf32> to vector<8x32xbf16>
    %c4_i32_28 = arith.constant 4 : i32
    %122 = arith.muli %c0_i32_12, %c4_i32_28 : i32
    %c2_i32 = arith.constant 2 : i32
    %123 = arith.addi %122, %c2_i32 : i32
    %124 = arith.addi %15, %123 : i32
    %125 = tpu.concatenate %120, %121 in 1 : vector<8x32xbf16>, vector<8x32xbf16> -> vector<8x64xbf16>
    %c0_29 = arith.constant 0 : index
    %c0_30 = arith.constant 0 : index
    %126 = vector.load %arg4[%c0_29, %c0_30] : memref<64x256xbf16, #tpu.memory_space<vmem>>, vector<64x256xbf16>
    %cst_31 = arith.constant dense<0.000000e+00> : vector<8x256xf32>
    %127 = tpu.matmul %125, %126, %cst_31 {dimension_numbers = #tpu.dot_dimension_numbers<[1], [0], [0], [1], [0, 0, 1, 1], [], []>} : vector<8x64xbf16>, vector<64x256xbf16>, vector<8x256xf32> -> vector<8x256xf32>
    %128 = vector.extract_strided_slice %127 {offsets = [0, 128], sizes = [8, 128], strides = [1, 1]} : vector<8x256xf32> to vector<8x128xf32>
    %129 = vector.broadcast %11 : vector<1x128xf32> to vector<8x128xf32>
    %130 = arith.addf %128, %129 : vector<8x128xf32>
    %131 = vector.broadcast %8 : vector<1x128xf32> to vector<8x128xf32>
    %132 = arith.mulf %130, %131 : vector<8x128xf32>
    %133 = math.tanh %132 : vector<8x128xf32>
    %134 = vector.broadcast %8 : vector<1x128xf32> to vector<8x128xf32>
    %135 = arith.mulf %133, %134 : vector<8x128xf32>
    %136 = vector.broadcast %10 : vector<1x128xf32> to vector<8x128xf32>
    %137 = arith.addf %135, %136 : vector<8x128xf32>
    %138 = vector.extract_strided_slice %137 {offsets = [0, 32], sizes = [8, 32], strides = [1, 1]} : vector<8x128xf32> to vector<8x32xf32>
    %139 = arith.mulf %138, %92 : vector<8x32xf32>
    %140 = vector.extract_strided_slice %137 {offsets = [0, 0], sizes = [8, 32], strides = [1, 1]} : vector<8x128xf32> to vector<8x32xf32>
    %141 = vector.extract_strided_slice %137 {offsets = [0, 64], sizes = [8, 32], strides = [1, 1]} : vector<8x128xf32> to vector<8x32xf32>
    %142 = arith.mulf %140, %141 : vector<8x32xf32>
    %143 = arith.addf %139, %142 : vector<8x32xf32>
    %144 = vector.extract_strided_slice %137 {offsets = [0, 96], sizes = [8, 32], strides = [1, 1]} : vector<8x128xf32> to vector<8x32xf32>
    %145 = math.tanh %143 : vector<8x32xf32>
    %146 = arith.mulf %144, %145 : vector<8x32xf32>
    %147 = arith.index_cast %123 : i32 to index
    %c0_32 = arith.constant 0 : index
    %c0_33 = arith.constant 0 : index
    %148 = vector.load %arg3[%147, %c0_32, %c0_33] : memref<8x8x128xf32, #tpu.memory_space<vmem>>, vector<1x8x128xf32>
    %149 = vector.shape_cast %148 : vector<1x8x128xf32> to vector<8x128xf32>
    %150 = vector.extract_strided_slice %127 {offsets = [0, 0], sizes = [8, 128], strides = [1, 1]} : vector<8x256xf32> to vector<8x128xf32>
    %151 = arith.addf %149, %150 : vector<8x128xf32>
    %152 = vector.broadcast %8 : vector<1x128xf32> to vector<8x128xf32>
    %153 = arith.mulf %151, %152 : vector<8x128xf32>
    %154 = math.tanh %153 : vector<8x128xf32>
    %155 = vector.broadcast %8 : vector<1x128xf32> to vector<8x128xf32>
    %156 = arith.mulf %154, %155 : vector<8x128xf32>
    %157 = vector.broadcast %10 : vector<1x128xf32> to vector<8x128xf32>
    %158 = arith.addf %156, %157 : vector<8x128xf32>
    %159 = vector.extract_strided_slice %158 {offsets = [0, 32], sizes = [8, 32], strides = [1, 1]} : vector<8x128xf32> to vector<8x32xf32>
    %160 = arith.mulf %159, %113 : vector<8x32xf32>
    %161 = vector.extract_strided_slice %158 {offsets = [0, 0], sizes = [8, 32], strides = [1, 1]} : vector<8x128xf32> to vector<8x32xf32>
    %162 = vector.extract_strided_slice %158 {offsets = [0, 64], sizes = [8, 32], strides = [1, 1]} : vector<8x128xf32> to vector<8x32xf32>
    %163 = arith.mulf %161, %162 : vector<8x32xf32>
    %164 = arith.addf %160, %163 : vector<8x32xf32>
    %165 = vector.extract_strided_slice %158 {offsets = [0, 96], sizes = [8, 32], strides = [1, 1]} : vector<8x128xf32> to vector<8x32xf32>
    %166 = math.tanh %164 : vector<8x32xf32>
    %167 = arith.mulf %165, %166 : vector<8x32xf32>
    %c7_i32_34 = arith.constant 7 : i32
    %168 = arith.cmpi eq, %124, %c7_i32_34 : i32
    %169 = arith.extui %168 : i1 to i32
    %c0_i32_35 = arith.constant 0 : i32
    %170 = arith.cmpi ne, %169, %c0_i32_35 : i32
    scf.if %170 {
      %442 = arith.extf %120 : vector<8x32xbf16> to vector<8x32xf32>
      %c0_94 = arith.constant 0 : index
      %c0_95 = arith.constant 0 : index
      %c0_96 = arith.constant 0 : index
      %443 = vector.load %arg7[%c0_94, %c0_95, %c0_96] : memref<2x8x32xf32, #tpu.memory_space<vmem>>, vector<1x8x32xf32>
      %444 = vector.shape_cast %443 : vector<1x8x32xf32> to vector<8x32xf32>
      %445 = vector.shape_cast %442 : vector<8x32xf32> to vector<1x8x32xf32>
      tpu.vector_store %arg7[%c0_94, %c0_95, %c0_96], %445 {strides = array<i32>} : memref<2x8x32xf32, #tpu.memory_space<vmem>>, vector<1x8x32xf32>,
      %c1 = arith.constant 1 : index
      %c0_97 = arith.constant 0 : index
      %c0_98 = arith.constant 0 : index
      %446 = vector.load %arg7[%c1, %c0_97, %c0_98] : memref<2x8x32xf32, #tpu.memory_space<vmem>>, vector<1x8x32xf32>
      %447 = vector.shape_cast %446 : vector<1x8x32xf32> to vector<8x32xf32>
      %448 = vector.shape_cast %146 : vector<8x32xf32> to vector<1x8x32xf32>
      tpu.vector_store %arg7[%c1, %c0_97, %c0_98], %448 {strides = array<i32>} : memref<2x8x32xf32, #tpu.memory_space<vmem>>, vector<1x8x32xf32>,
    } else {
    }
    %171 = arith.truncf %167 : vector<8x32xf32> to vector<8x32xbf16>
    %172 = arith.truncf %146 : vector<8x32xf32> to vector<8x32xbf16>
    %c4_i32_36 = arith.constant 4 : i32
    %173 = arith.muli %c0_i32_12, %c4_i32_36 : i32
    %c3_i32 = arith.constant 3 : i32
    %174 = arith.addi %173, %c3_i32 : i32
    %175 = arith.addi %15, %174 : i32
    %176 = tpu.concatenate %171, %172 in 1 : vector<8x32xbf16>, vector<8x32xbf16> -> vector<8x64xbf16>
    %c0_37 = arith.constant 0 : index
    %c0_38 = arith.constant 0 : index
    %177 = vector.load %arg4[%c0_37, %c0_38] : memref<64x256xbf16, #tpu.memory_space<vmem>>, vector<64x256xbf16>
    %cst_39 = arith.constant dense<0.000000e+00> : vector<8x256xf32>
    %178 = tpu.matmul %176, %177, %cst_39 {dimension_numbers = #tpu.dot_dimension_numbers<[1], [0], [0], [1], [0, 0, 1, 1], [], []>} : vector<8x64xbf16>, vector<64x256xbf16>, vector<8x256xf32> -> vector<8x256xf32>
    %179 = vector.extract_strided_slice %178 {offsets = [0, 128], sizes = [8, 128], strides = [1, 1]} : vector<8x256xf32> to vector<8x128xf32>
    %180 = vector.broadcast %11 : vector<1x128xf32> to vector<8x128xf32>
    %181 = arith.addf %179, %180 : vector<8x128xf32>
    %182 = vector.broadcast %8 : vector<1x128xf32> to vector<8x128xf32>
    %183 = arith.mulf %181, %182 : vector<8x128xf32>
    %184 = math.tanh %183 : vector<8x128xf32>
    %185 = vector.broadcast %8 : vector<1x128xf32> to vector<8x128xf32>
    %186 = arith.mulf %184, %185 : vector<8x128xf32>
    %187 = vector.broadcast %10 : vector<1x128xf32> to vector<8x128xf32>
    %188 = arith.addf %186, %187 : vector<8x128xf32>
    %189 = vector.extract_strided_slice %188 {offsets = [0, 32], sizes = [8, 32], strides = [1, 1]} : vector<8x128xf32> to vector<8x32xf32>
    %190 = arith.mulf %189, %143 : vector<8x32xf32>
    %191 = vector.extract_strided_slice %188 {offsets = [0, 0], sizes = [8, 32], strides = [1, 1]} : vector<8x128xf32> to vector<8x32xf32>
    %192 = vector.extract_strided_slice %188 {offsets = [0, 64], sizes = [8, 32], strides = [1, 1]} : vector<8x128xf32> to vector<8x32xf32>
    %193 = arith.mulf %191, %192 : vector<8x32xf32>
    %194 = arith.addf %190, %193 : vector<8x32xf32>
    %195 = vector.extract_strided_slice %188 {offsets = [0, 96], sizes = [8, 32], strides = [1, 1]} : vector<8x128xf32> to vector<8x32xf32>
    %196 = math.tanh %194 : vector<8x32xf32>
    %197 = arith.mulf %195, %196 : vector<8x32xf32>
    %198 = arith.index_cast %174 : i32 to index
    %c0_40 = arith.constant 0 : index
    %c0_41 = arith.constant 0 : index
    %199 = vector.load %arg3[%198, %c0_40, %c0_41] : memref<8x8x128xf32, #tpu.memory_space<vmem>>, vector<1x8x128xf32>
    %200 = vector.shape_cast %199 : vector<1x8x128xf32> to vector<8x128xf32>
    %201 = vector.extract_strided_slice %178 {offsets = [0, 0], sizes = [8, 128], strides = [1, 1]} : vector<8x256xf32> to vector<8x128xf32>
    %202 = arith.addf %200, %201 : vector<8x128xf32>
    %203 = vector.broadcast %8 : vector<1x128xf32> to vector<8x128xf32>
    %204 = arith.mulf %202, %203 : vector<8x128xf32>
    %205 = math.tanh %204 : vector<8x128xf32>
    %206 = vector.broadcast %8 : vector<1x128xf32> to vector<8x128xf32>
    %207 = arith.mulf %205, %206 : vector<8x128xf32>
    %208 = vector.broadcast %10 : vector<1x128xf32> to vector<8x128xf32>
    %209 = arith.addf %207, %208 : vector<8x128xf32>
    %210 = vector.extract_strided_slice %209 {offsets = [0, 32], sizes = [8, 32], strides = [1, 1]} : vector<8x128xf32> to vector<8x32xf32>
    %211 = arith.mulf %210, %164 : vector<8x32xf32>
    %212 = vector.extract_strided_slice %209 {offsets = [0, 0], sizes = [8, 32], strides = [1, 1]} : vector<8x128xf32> to vector<8x32xf32>
    %213 = vector.extract_strided_slice %209 {offsets = [0, 64], sizes = [8, 32], strides = [1, 1]} : vector<8x128xf32> to vector<8x32xf32>
    %214 = arith.mulf %212, %213 : vector<8x32xf32>
    %215 = arith.addf %211, %214 : vector<8x32xf32>
    %216 = vector.extract_strided_slice %209 {offsets = [0, 96], sizes = [8, 32], strides = [1, 1]} : vector<8x128xf32> to vector<8x32xf32>
    %217 = math.tanh %215 : vector<8x32xf32>
    %218 = arith.mulf %216, %217 : vector<8x32xf32>
    %c7_i32_42 = arith.constant 7 : i32
    %219 = arith.cmpi eq, %175, %c7_i32_42 : i32
    %220 = arith.extui %219 : i1 to i32
    %c0_i32_43 = arith.constant 0 : i32
    %221 = arith.cmpi ne, %220, %c0_i32_43 : i32
    scf.if %221 {
      %442 = arith.extf %171 : vector<8x32xbf16> to vector<8x32xf32>
      %c0_94 = arith.constant 0 : index
      %c0_95 = arith.constant 0 : index
      %c0_96 = arith.constant 0 : index
      %443 = vector.load %arg7[%c0_94, %c0_95, %c0_96] : memref<2x8x32xf32, #tpu.memory_space<vmem>>, vector<1x8x32xf32>
      %444 = vector.shape_cast %443 : vector<1x8x32xf32> to vector<8x32xf32>
      %445 = vector.shape_cast %442 : vector<8x32xf32> to vector<1x8x32xf32>
      tpu.vector_store %arg7[%c0_94, %c0_95, %c0_96], %445 {strides = array<i32>} : memref<2x8x32xf32, #tpu.memory_space<vmem>>, vector<1x8x32xf32>,
      %c1 = arith.constant 1 : index
      %c0_97 = arith.constant 0 : index
      %c0_98 = arith.constant 0 : index
      %446 = vector.load %arg7[%c1, %c0_97, %c0_98] : memref<2x8x32xf32, #tpu.memory_space<vmem>>, vector<1x8x32xf32>
      %447 = vector.shape_cast %446 : vector<1x8x32xf32> to vector<8x32xf32>
      %448 = vector.shape_cast %197 : vector<8x32xf32> to vector<1x8x32xf32>
      tpu.vector_store %arg7[%c1, %c0_97, %c0_98], %448 {strides = array<i32>} : memref<2x8x32xf32, #tpu.memory_space<vmem>>, vector<1x8x32xf32>,
    } else {
    }
    %222 = arith.truncf %218 : vector<8x32xf32> to vector<8x32xbf16>
    %223 = arith.truncf %197 : vector<8x32xf32> to vector<8x32xbf16>
    %224 = tpu.concatenate %44, %95, %146, %197 in 1 : vector<8x32xf32>, vector<8x32xf32>, vector<8x32xf32>, vector<8x32xf32> -> vector<8x128xf32>
    %225 = arith.index_cast %c0_i32_12 : i32 to index
    %c0_44 = arith.constant 0 : index
    %c0_45 = arith.constant 0 : index
    %226 = vector.load %arg6[%225, %c0_44, %c0_45] : memref<2x8x128xf32, #tpu.memory_space<vmem>>, vector<1x8x128xf32>
    %227 = vector.shape_cast %226 : vector<1x8x128xf32> to vector<8x128xf32>
    %228 = vector.shape_cast %224 : vector<8x128xf32> to vector<1x8x128xf32>
    tpu.vector_store %arg6[%225, %c0_44, %c0_45], %228 {strides = array<i32>} : memref<2x8x128xf32, #tpu.memory_space<vmem>>, vector<1x8x128xf32>,
    %c1_i32_46 = arith.constant 1 : i32
    %c4_i32_47 = arith.constant 4 : i32
    %229 = arith.muli %c1_i32_46, %c4_i32_47 : i32
    %c0_i32_48 = arith.constant 0 : i32
    %230 = arith.addi %229, %c0_i32_48 : i32
    %231 = arith.addi %15, %230 : i32
    %232 = tpu.concatenate %222, %223 in 1 : vector<8x32xbf16>, vector<8x32xbf16> -> vector<8x64xbf16>
    %c0_49 = arith.constant 0 : index
    %c0_50 = arith.constant 0 : index
    %233 = vector.load %arg4[%c0_49, %c0_50] : memref<64x256xbf16, #tpu.memory_space<vmem>>, vector<64x256xbf16>
    %cst_51 = arith.constant dense<0.000000e+00> : vector<8x256xf32>
    %234 = tpu.matmul %232, %233, %cst_51 {dimension_numbers = #tpu.dot_dimension_numbers<[1], [0], [0], [1], [0, 0, 1, 1], [], []>} : vector<8x64xbf16>, vector<64x256xbf16>, vector<8x256xf32> -> vector<8x256xf32>
    %235 = vector.extract_strided_slice %234 {offsets = [0, 128], sizes = [8, 128], strides = [1, 1]} : vector<8x256xf32> to vector<8x128xf32>
    %236 = vector.broadcast %11 : vector<1x128xf32> to vector<8x128xf32>
    %237 = arith.addf %235, %236 : vector<8x128xf32>
    %238 = vector.broadcast %8 : vector<1x128xf32> to vector<8x128xf32>
    %239 = arith.mulf %237, %238 : vector<8x128xf32>
    %240 = math.tanh %239 : vector<8x128xf32>
    %241 = vector.broadcast %8 : vector<1x128xf32> to vector<8x128xf32>
    %242 = arith.mulf %240, %241 : vector<8x128xf32>
    %243 = vector.broadcast %10 : vector<1x128xf32> to vector<8x128xf32>
    %244 = arith.addf %242, %243 : vector<8x128xf32>
    %245 = vector.extract_strided_slice %244 {offsets = [0, 32], sizes = [8, 32], strides = [1, 1]} : vector<8x128xf32> to vector<8x32xf32>
    %246 = arith.mulf %245, %194 : vector<8x32xf32>
    %247 = vector.extract_strided_slice %244 {offsets = [0, 0], sizes = [8, 32], strides = [1, 1]} : vector<8x128xf32> to vector<8x32xf32>
    %248 = vector.extract_strided_slice %244 {offsets = [0, 64], sizes = [8, 32], strides = [1, 1]} : vector<8x128xf32> to vector<8x32xf32>
    %249 = arith.mulf %247, %248 : vector<8x32xf32>
    %250 = arith.addf %246, %249 : vector<8x32xf32>
    %251 = vector.extract_strided_slice %244 {offsets = [0, 96], sizes = [8, 32], strides = [1, 1]} : vector<8x128xf32> to vector<8x32xf32>
    %252 = math.tanh %250 : vector<8x32xf32>
    %253 = arith.mulf %251, %252 : vector<8x32xf32>
    %254 = arith.index_cast %230 : i32 to index
    %c0_52 = arith.constant 0 : index
    %c0_53 = arith.constant 0 : index
    %255 = vector.load %arg3[%254, %c0_52, %c0_53] : memref<8x8x128xf32, #tpu.memory_space<vmem>>, vector<1x8x128xf32>
    %256 = vector.shape_cast %255 : vector<1x8x128xf32> to vector<8x128xf32>
    %257 = vector.extract_strided_slice %234 {offsets = [0, 0], sizes = [8, 128], strides = [1, 1]} : vector<8x256xf32> to vector<8x128xf32>
    %258 = arith.addf %256, %257 : vector<8x128xf32>
    %259 = vector.broadcast %8 : vector<1x128xf32> to vector<8x128xf32>
    %260 = arith.mulf %258, %259 : vector<8x128xf32>
    %261 = math.tanh %260 : vector<8x128xf32>
    %262 = vector.broadcast %8 : vector<1x128xf32> to vector<8x128xf32>
    %263 = arith.mulf %261, %262 : vector<8x128xf32>
    %264 = vector.broadcast %10 : vector<1x128xf32> to vector<8x128xf32>
    %265 = arith.addf %263, %264 : vector<8x128xf32>
    %266 = vector.extract_strided_slice %265 {offsets = [0, 32], sizes = [8, 32], strides = [1, 1]} : vector<8x128xf32> to vector<8x32xf32>
    %267 = arith.mulf %266, %215 : vector<8x32xf32>
    %268 = vector.extract_strided_slice %265 {offsets = [0, 0], sizes = [8, 32], strides = [1, 1]} : vector<8x128xf32> to vector<8x32xf32>
    %269 = vector.extract_strided_slice %265 {offsets = [0, 64], sizes = [8, 32], strides = [1, 1]} : vector<8x128xf32> to vector<8x32xf32>
    %270 = arith.mulf %268, %269 : vector<8x32xf32>
    %271 = arith.addf %267, %270 : vector<8x32xf32>
    %272 = vector.extract_strided_slice %265 {offsets = [0, 96], sizes = [8, 32], strides = [1, 1]} : vector<8x128xf32> to vector<8x32xf32>
    %273 = math.tanh %271 : vector<8x32xf32>
    %274 = arith.mulf %272, %273 : vector<8x32xf32>
    %c7_i32_54 = arith.constant 7 : i32
    %275 = arith.cmpi eq, %231, %c7_i32_54 : i32
    %276 = arith.extui %275 : i1 to i32
    %c0_i32_55 = arith.constant 0 : i32
    %277 = arith.cmpi ne, %276, %c0_i32_55 : i32
    scf.if %277 {
      %442 = arith.extf %222 : vector<8x32xbf16> to vector<8x32xf32>
      %c0_94 = arith.constant 0 : index
      %c0_95 = arith.constant 0 : index
      %c0_96 = arith.constant 0 : index
      %443 = vector.load %arg7[%c0_94, %c0_95, %c0_96] : memref<2x8x32xf32, #tpu.memory_space<vmem>>, vector<1x8x32xf32>
      %444 = vector.shape_cast %443 : vector<1x8x32xf32> to vector<8x32xf32>
      %445 = vector.shape_cast %442 : vector<8x32xf32> to vector<1x8x32xf32>
      tpu.vector_store %arg7[%c0_94, %c0_95, %c0_96], %445 {strides = array<i32>} : memref<2x8x32xf32, #tpu.memory_space<vmem>>, vector<1x8x32xf32>,
      %c1 = arith.constant 1 : index
      %c0_97 = arith.constant 0 : index
      %c0_98 = arith.constant 0 : index
      %446 = vector.load %arg7[%c1, %c0_97, %c0_98] : memref<2x8x32xf32, #tpu.memory_space<vmem>>, vector<1x8x32xf32>
      %447 = vector.shape_cast %446 : vector<1x8x32xf32> to vector<8x32xf32>
      %448 = vector.shape_cast %253 : vector<8x32xf32> to vector<1x8x32xf32>
      tpu.vector_store %arg7[%c1, %c0_97, %c0_98], %448 {strides = array<i32>} : memref<2x8x32xf32, #tpu.memory_space<vmem>>, vector<1x8x32xf32>,
    } else {
    }
    %278 = arith.truncf %274 : vector<8x32xf32> to vector<8x32xbf16>
    %279 = arith.truncf %253 : vector<8x32xf32> to vector<8x32xbf16>
    %c4_i32_56 = arith.constant 4 : i32
    %280 = arith.muli %c1_i32_46, %c4_i32_56 : i32
    %c1_i32_57 = arith.constant 1 : i32
    %281 = arith.addi %280, %c1_i32_57 : i32
    %282 = arith.addi %15, %281 : i32
    %283 = tpu.concatenate %278, %279 in 1 : vector<8x32xbf16>, vector<8x32xbf16> -> vector<8x64xbf16>
    %c0_58 = arith.constant 0 : index
    %c0_59 = arith.constant 0 : index
    %284 = vector.load %arg4[%c0_58, %c0_59] : memref<64x256xbf16, #tpu.memory_space<vmem>>, vector<64x256xbf16>
    %cst_60 = arith.constant dense<0.000000e+00> : vector<8x256xf32>
    %285 = tpu.matmul %283, %284, %cst_60 {dimension_numbers = #tpu.dot_dimension_numbers<[1], [0], [0], [1], [0, 0, 1, 1], [], []>} : vector<8x64xbf16>, vector<64x256xbf16>, vector<8x256xf32> -> vector<8x256xf32>
    %286 = vector.extract_strided_slice %285 {offsets = [0, 128], sizes = [8, 128], strides = [1, 1]} : vector<8x256xf32> to vector<8x128xf32>
    %287 = vector.broadcast %11 : vector<1x128xf32> to vector<8x128xf32>
    %288 = arith.addf %286, %287 : vector<8x128xf32>
    %289 = vector.broadcast %8 : vector<1x128xf32> to vector<8x128xf32>
    %290 = arith.mulf %288, %289 : vector<8x128xf32>
    %291 = math.tanh %290 : vector<8x128xf32>
    %292 = vector.broadcast %8 : vector<1x128xf32> to vector<8x128xf32>
    %293 = arith.mulf %291, %292 : vector<8x128xf32>
    %294 = vector.broadcast %10 : vector<1x128xf32> to vector<8x128xf32>
    %295 = arith.addf %293, %294 : vector<8x128xf32>
    %296 = vector.extract_strided_slice %295 {offsets = [0, 32], sizes = [8, 32], strides = [1, 1]} : vector<8x128xf32> to vector<8x32xf32>
    %297 = arith.mulf %296, %250 : vector<8x32xf32>
    %298 = vector.extract_strided_slice %295 {offsets = [0, 0], sizes = [8, 32], strides = [1, 1]} : vector<8x128xf32> to vector<8x32xf32>
    %299 = vector.extract_strided_slice %295 {offsets = [0, 64], sizes = [8, 32], strides = [1, 1]} : vector<8x128xf32> to vector<8x32xf32>
    %300 = arith.mulf %298, %299 : vector<8x32xf32>
    %301 = arith.addf %297, %300 : vector<8x32xf32>
    %302 = vector.extract_strided_slice %295 {offsets = [0, 96], sizes = [8, 32], strides = [1, 1]} : vector<8x128xf32> to vector<8x32xf32>
    %303 = math.tanh %301 : vector<8x32xf32>
    %304 = arith.mulf %302, %303 : vector<8x32xf32>
    %305 = arith.index_cast %281 : i32 to index
    %c0_61 = arith.constant 0 : index
    %c0_62 = arith.constant 0 : index
    %306 = vector.load %arg3[%305, %c0_61, %c0_62] : memref<8x8x128xf32, #tpu.memory_space<vmem>>, vector<1x8x128xf32>
    %307 = vector.shape_cast %306 : vector<1x8x128xf32> to vector<8x128xf32>
    %308 = vector.extract_strided_slice %285 {offsets = [0, 0], sizes = [8, 128], strides = [1, 1]} : vector<8x256xf32> to vector<8x128xf32>
    %309 = arith.addf %307, %308 : vector<8x128xf32>
    %310 = vector.broadcast %8 : vector<1x128xf32> to vector<8x128xf32>
    %311 = arith.mulf %309, %310 : vector<8x128xf32>
    %312 = math.tanh %311 : vector<8x128xf32>
    %313 = vector.broadcast %8 : vector<1x128xf32> to vector<8x128xf32>
    %314 = arith.mulf %312, %313 : vector<8x128xf32>
    %315 = vector.broadcast %10 : vector<1x128xf32> to vector<8x128xf32>
    %316 = arith.addf %314, %315 : vector<8x128xf32>
    %317 = vector.extract_strided_slice %316 {offsets = [0, 32], sizes = [8, 32], strides = [1, 1]} : vector<8x128xf32> to vector<8x32xf32>
    %318 = arith.mulf %317, %271 : vector<8x32xf32>
    %319 = vector.extract_strided_slice %316 {offsets = [0, 0], sizes = [8, 32], strides = [1, 1]} : vector<8x128xf32> to vector<8x32xf32>
    %320 = vector.extract_strided_slice %316 {offsets = [0, 64], sizes = [8, 32], strides = [1, 1]} : vector<8x128xf32> to vector<8x32xf32>
    %321 = arith.mulf %319, %320 : vector<8x32xf32>
    %322 = arith.addf %318, %321 : vector<8x32xf32>
    %323 = vector.extract_strided_slice %316 {offsets = [0, 96], sizes = [8, 32], strides = [1, 1]} : vector<8x128xf32> to vector<8x32xf32>
    %324 = math.tanh %322 : vector<8x32xf32>
    %325 = arith.mulf %323, %324 : vector<8x32xf32>
    %c7_i32_63 = arith.constant 7 : i32
    %326 = arith.cmpi eq, %282, %c7_i32_63 : i32
    %327 = arith.extui %326 : i1 to i32
    %c0_i32_64 = arith.constant 0 : i32
    %328 = arith.cmpi ne, %327, %c0_i32_64 : i32
    scf.if %328 {
      %442 = arith.extf %278 : vector<8x32xbf16> to vector<8x32xf32>
      %c0_94 = arith.constant 0 : index
      %c0_95 = arith.constant 0 : index
      %c0_96 = arith.constant 0 : index
      %443 = vector.load %arg7[%c0_94, %c0_95, %c0_96] : memref<2x8x32xf32, #tpu.memory_space<vmem>>, vector<1x8x32xf32>
      %444 = vector.shape_cast %443 : vector<1x8x32xf32> to vector<8x32xf32>
      %445 = vector.shape_cast %442 : vector<8x32xf32> to vector<1x8x32xf32>
      tpu.vector_store %arg7[%c0_94, %c0_95, %c0_96], %445 {strides = array<i32>} : memref<2x8x32xf32, #tpu.memory_space<vmem>>, vector<1x8x32xf32>,
      %c1 = arith.constant 1 : index
      %c0_97 = arith.constant 0 : index
      %c0_98 = arith.constant 0 : index
      %446 = vector.load %arg7[%c1, %c0_97, %c0_98] : memref<2x8x32xf32, #tpu.memory_space<vmem>>, vector<1x8x32xf32>
      %447 = vector.shape_cast %446 : vector<1x8x32xf32> to vector<8x32xf32>
      %448 = vector.shape_cast %304 : vector<8x32xf32> to vector<1x8x32xf32>
      tpu.vector_store %arg7[%c1, %c0_97, %c0_98], %448 {strides = array<i32>} : memref<2x8x32xf32, #tpu.memory_space<vmem>>, vector<1x8x32xf32>,
    } else {
    }
    %329 = arith.truncf %325 : vector<8x32xf32> to vector<8x32xbf16>
    %330 = arith.truncf %304 : vector<8x32xf32> to vector<8x32xbf16>
    %c4_i32_65 = arith.constant 4 : i32
    %331 = arith.muli %c1_i32_46, %c4_i32_65 : i32
    %c2_i32_66 = arith.constant 2 : i32
    %332 = arith.addi %331, %c2_i32_66 : i32
    %333 = arith.addi %15, %332 : i32
    %334 = tpu.concatenate %329, %330 in 1 : vector<8x32xbf16>, vector<8x32xbf16> -> vector<8x64xbf16>
    %c0_67 = arith.constant 0 : index
    %c0_68 = arith.constant 0 : index
    %335 = vector.load %arg4[%c0_67, %c0_68] : memref<64x256xbf16, #tpu.memory_space<vmem>>, vector<64x256xbf16>
    %cst_69 = arith.constant dense<0.000000e+00> : vector<8x256xf32>
    %336 = tpu.matmul %334, %335, %cst_69 {dimension_numbers = #tpu.dot_dimension_numbers<[1], [0], [0], [1], [0, 0, 1, 1], [], []>} : vector<8x64xbf16>, vector<64x256xbf16>, vector<8x256xf32> -> vector<8x256xf32>
    %337 = vector.extract_strided_slice %336 {offsets = [0, 128], sizes = [8, 128], strides = [1, 1]} : vector<8x256xf32> to vector<8x128xf32>
    %338 = vector.broadcast %11 : vector<1x128xf32> to vector<8x128xf32>
    %339 = arith.addf %337, %338 : vector<8x128xf32>
    %340 = vector.broadcast %8 : vector<1x128xf32> to vector<8x128xf32>
    %341 = arith.mulf %339, %340 : vector<8x128xf32>
    %342 = math.tanh %341 : vector<8x128xf32>
    %343 = vector.broadcast %8 : vector<1x128xf32> to vector<8x128xf32>
    %344 = arith.mulf %342, %343 : vector<8x128xf32>
    %345 = vector.broadcast %10 : vector<1x128xf32> to vector<8x128xf32>
    %346 = arith.addf %344, %345 : vector<8x128xf32>
    %347 = vector.extract_strided_slice %346 {offsets = [0, 32], sizes = [8, 32], strides = [1, 1]} : vector<8x128xf32> to vector<8x32xf32>
    %348 = arith.mulf %347, %301 : vector<8x32xf32>
    %349 = vector.extract_strided_slice %346 {offsets = [0, 0], sizes = [8, 32], strides = [1, 1]} : vector<8x128xf32> to vector<8x32xf32>
    %350 = vector.extract_strided_slice %346 {offsets = [0, 64], sizes = [8, 32], strides = [1, 1]} : vector<8x128xf32> to vector<8x32xf32>
    %351 = arith.mulf %349, %350 : vector<8x32xf32>
    %352 = arith.addf %348, %351 : vector<8x32xf32>
    %353 = vector.extract_strided_slice %346 {offsets = [0, 96], sizes = [8, 32], strides = [1, 1]} : vector<8x128xf32> to vector<8x32xf32>
    %354 = math.tanh %352 : vector<8x32xf32>
    %355 = arith.mulf %353, %354 : vector<8x32xf32>
    %356 = arith.index_cast %332 : i32 to index
    %c0_70 = arith.constant 0 : index
    %c0_71 = arith.constant 0 : index
    %357 = vector.load %arg3[%356, %c0_70, %c0_71] : memref<8x8x128xf32, #tpu.memory_space<vmem>>, vector<1x8x128xf32>
    %358 = vector.shape_cast %357 : vector<1x8x128xf32> to vector<8x128xf32>
    %359 = vector.extract_strided_slice %336 {offsets = [0, 0], sizes = [8, 128], strides = [1, 1]} : vector<8x256xf32> to vector<8x128xf32>
    %360 = arith.addf %358, %359 : vector<8x128xf32>
    %361 = vector.broadcast %8 : vector<1x128xf32> to vector<8x128xf32>
    %362 = arith.mulf %360, %361 : vector<8x128xf32>
    %363 = math.tanh %362 : vector<8x128xf32>
    %364 = vector.broadcast %8 : vector<1x128xf32> to vector<8x128xf32>
    %365 = arith.mulf %363, %364 : vector<8x128xf32>
    %366 = vector.broadcast %10 : vector<1x128xf32> to vector<8x128xf32>
    %367 = arith.addf %365, %366 : vector<8x128xf32>
    %368 = vector.extract_strided_slice %367 {offsets = [0, 32], sizes = [8, 32], strides = [1, 1]} : vector<8x128xf32> to vector<8x32xf32>
    %369 = arith.mulf %368, %322 : vector<8x32xf32>
    %370 = vector.extract_strided_slice %367 {offsets = [0, 0], sizes = [8, 32], strides = [1, 1]} : vector<8x128xf32> to vector<8x32xf32>
    %371 = vector.extract_strided_slice %367 {offsets = [0, 64], sizes = [8, 32], strides = [1, 1]} : vector<8x128xf32> to vector<8x32xf32>
    %372 = arith.mulf %370, %371 : vector<8x32xf32>
    %373 = arith.addf %369, %372 : vector<8x32xf32>
    %374 = vector.extract_strided_slice %367 {offsets = [0, 96], sizes = [8, 32], strides = [1, 1]} : vector<8x128xf32> to vector<8x32xf32>
    %375 = math.tanh %373 : vector<8x32xf32>
    %376 = arith.mulf %374, %375 : vector<8x32xf32>
    %c7_i32_72 = arith.constant 7 : i32
    %377 = arith.cmpi eq, %333, %c7_i32_72 : i32
    %378 = arith.extui %377 : i1 to i32
    %c0_i32_73 = arith.constant 0 : i32
    %379 = arith.cmpi ne, %378, %c0_i32_73 : i32
    scf.if %379 {
      %442 = arith.extf %329 : vector<8x32xbf16> to vector<8x32xf32>
      %c0_94 = arith.constant 0 : index
      %c0_95 = arith.constant 0 : index
      %c0_96 = arith.constant 0 : index
      %443 = vector.load %arg7[%c0_94, %c0_95, %c0_96] : memref<2x8x32xf32, #tpu.memory_space<vmem>>, vector<1x8x32xf32>
      %444 = vector.shape_cast %443 : vector<1x8x32xf32> to vector<8x32xf32>
      %445 = vector.shape_cast %442 : vector<8x32xf32> to vector<1x8x32xf32>
      tpu.vector_store %arg7[%c0_94, %c0_95, %c0_96], %445 {strides = array<i32>} : memref<2x8x32xf32, #tpu.memory_space<vmem>>, vector<1x8x32xf32>,
      %c1 = arith.constant 1 : index
      %c0_97 = arith.constant 0 : index
      %c0_98 = arith.constant 0 : index
      %446 = vector.load %arg7[%c1, %c0_97, %c0_98] : memref<2x8x32xf32, #tpu.memory_space<vmem>>, vector<1x8x32xf32>
      %447 = vector.shape_cast %446 : vector<1x8x32xf32> to vector<8x32xf32>
      %448 = vector.shape_cast %355 : vector<8x32xf32> to vector<1x8x32xf32>
      tpu.vector_store %arg7[%c1, %c0_97, %c0_98], %448 {strides = array<i32>} : memref<2x8x32xf32, #tpu.memory_space<vmem>>, vector<1x8x32xf32>,
    } else {
    }
    %380 = arith.truncf %376 : vector<8x32xf32> to vector<8x32xbf16>
    %381 = arith.truncf %355 : vector<8x32xf32> to vector<8x32xbf16>
    %c4_i32_74 = arith.constant 4 : i32
    %382 = arith.muli %c1_i32_46, %c4_i32_74 : i32
    %c3_i32_75 = arith.constant 3 : i32
    %383 = arith.addi %382, %c3_i32_75 : i32
    %384 = arith.addi %15, %383 : i32
    %385 = tpu.concatenate %380, %381 in 1 : vector<8x32xbf16>, vector<8x32xbf16> -> vector<8x64xbf16>
    %c0_76 = arith.constant 0 : index
    %c0_77 = arith.constant 0 : index
    %386 = vector.load %arg4[%c0_76, %c0_77] : memref<64x256xbf16, #tpu.memory_space<vmem>>, vector<64x256xbf16>
    %cst_78 = arith.constant dense<0.000000e+00> : vector<8x256xf32>
    %387 = tpu.matmul %385, %386, %cst_78 {dimension_numbers = #tpu.dot_dimension_numbers<[1], [0], [0], [1], [0, 0, 1, 1], [], []>} : vector<8x64xbf16>, vector<64x256xbf16>, vector<8x256xf32> -> vector<8x256xf32>
    %388 = vector.extract_strided_slice %387 {offsets = [0, 128], sizes = [8, 128], strides = [1, 1]} : vector<8x256xf32> to vector<8x128xf32>
    %389 = vector.broadcast %11 : vector<1x128xf32> to vector<8x128xf32>
    %390 = arith.addf %388, %389 : vector<8x128xf32>
    %391 = vector.broadcast %8 : vector<1x128xf32> to vector<8x128xf32>
    %392 = arith.mulf %390, %391 : vector<8x128xf32>
    %393 = math.tanh %392 : vector<8x128xf32>
    %394 = vector.broadcast %8 : vector<1x128xf32> to vector<8x128xf32>
    %395 = arith.mulf %393, %394 : vector<8x128xf32>
    %396 = vector.broadcast %10 : vector<1x128xf32> to vector<8x128xf32>
    %397 = arith.addf %395, %396 : vector<8x128xf32>
    %398 = vector.extract_strided_slice %397 {offsets = [0, 32], sizes = [8, 32], strides = [1, 1]} : vector<8x128xf32> to vector<8x32xf32>
    %399 = arith.mulf %398, %352 : vector<8x32xf32>
    %400 = vector.extract_strided_slice %397 {offsets = [0, 0], sizes = [8, 32], strides = [1, 1]} : vector<8x128xf32> to vector<8x32xf32>
    %401 = vector.extract_strided_slice %397 {offsets = [0, 64], sizes = [8, 32], strides = [1, 1]} : vector<8x128xf32> to vector<8x32xf32>
    %402 = arith.mulf %400, %401 : vector<8x32xf32>
    %403 = arith.addf %399, %402 : vector<8x32xf32>
    %404 = vector.extract_strided_slice %397 {offsets = [0, 96], sizes = [8, 32], strides = [1, 1]} : vector<8x128xf32> to vector<8x32xf32>
    %405 = math.tanh %403 : vector<8x32xf32>
    %406 = arith.mulf %404, %405 : vector<8x32xf32>
    %407 = arith.index_cast %383 : i32 to index
    %c0_79 = arith.constant 0 : index
    %c0_80 = arith.constant 0 : index
    %408 = vector.load %arg3[%407, %c0_79, %c0_80] : memref<8x8x128xf32, #tpu.memory_space<vmem>>, vector<1x8x128xf32>
    %409 = vector.shape_cast %408 : vector<1x8x128xf32> to vector<8x128xf32>
    %410 = vector.extract_strided_slice %387 {offsets = [0, 0], sizes = [8, 128], strides = [1, 1]} : vector<8x256xf32> to vector<8x128xf32>
    %411 = arith.addf %409, %410 : vector<8x128xf32>
    %412 = vector.broadcast %8 : vector<1x128xf32> to vector<8x128xf32>
    %413 = arith.mulf %411, %412 : vector<8x128xf32>
    %414 = math.tanh %413 : vector<8x128xf32>
    %415 = vector.broadcast %8 : vector<1x128xf32> to vector<8x128xf32>
    %416 = arith.mulf %414, %415 : vector<8x128xf32>
    %417 = vector.broadcast %10 : vector<1x128xf32> to vector<8x128xf32>
    %418 = arith.addf %416, %417 : vector<8x128xf32>
    %419 = vector.extract_strided_slice %418 {offsets = [0, 32], sizes = [8, 32], strides = [1, 1]} : vector<8x128xf32> to vector<8x32xf32>
    %420 = arith.mulf %419, %373 : vector<8x32xf32>
    %421 = vector.extract_strided_slice %418 {offsets = [0, 0], sizes = [8, 32], strides = [1, 1]} : vector<8x128xf32> to vector<8x32xf32>
    %422 = vector.extract_strided_slice %418 {offsets = [0, 64], sizes = [8, 32], strides = [1, 1]} : vector<8x128xf32> to vector<8x32xf32>
    %423 = arith.mulf %421, %422 : vector<8x32xf32>
    %424 = arith.addf %420, %423 : vector<8x32xf32>
    %425 = vector.extract_strided_slice %418 {offsets = [0, 96], sizes = [8, 32], strides = [1, 1]} : vector<8x128xf32> to vector<8x32xf32>
    %426 = math.tanh %424 : vector<8x32xf32>
    %427 = arith.mulf %425, %426 : vector<8x32xf32>
    %c7_i32_81 = arith.constant 7 : i32
    %428 = arith.cmpi eq, %384, %c7_i32_81 : i32
    %429 = arith.extui %428 : i1 to i32
    %c0_i32_82 = arith.constant 0 : i32
    %430 = arith.cmpi ne, %429, %c0_i32_82 : i32
    scf.if %430 {
      %442 = arith.extf %380 : vector<8x32xbf16> to vector<8x32xf32>
      %c0_94 = arith.constant 0 : index
      %c0_95 = arith.constant 0 : index
      %c0_96 = arith.constant 0 : index
      %443 = vector.load %arg7[%c0_94, %c0_95, %c0_96] : memref<2x8x32xf32, #tpu.memory_space<vmem>>, vector<1x8x32xf32>
      %444 = vector.shape_cast %443 : vector<1x8x32xf32> to vector<8x32xf32>
      %445 = vector.shape_cast %442 : vector<8x32xf32> to vector<1x8x32xf32>
      tpu.vector_store %arg7[%c0_94, %c0_95, %c0_96], %445 {strides = array<i32>} : memref<2x8x32xf32, #tpu.memory_space<vmem>>, vector<1x8x32xf32>,
      %c1 = arith.constant 1 : index
      %c0_97 = arith.constant 0 : index
      %c0_98 = arith.constant 0 : index
      %446 = vector.load %arg7[%c1, %c0_97, %c0_98] : memref<2x8x32xf32, #tpu.memory_space<vmem>>, vector<1x8x32xf32>
      %447 = vector.shape_cast %446 : vector<1x8x32xf32> to vector<8x32xf32>
      %448 = vector.shape_cast %406 : vector<8x32xf32> to vector<1x8x32xf32>
      tpu.vector_store %arg7[%c1, %c0_97, %c0_98], %448 {strides = array<i32>} : memref<2x8x32xf32, #tpu.memory_space<vmem>>, vector<1x8x32xf32>,
    } else {
    }
    %431 = arith.truncf %427 : vector<8x32xf32> to vector<8x32xbf16>
    %432 = arith.truncf %406 : vector<8x32xf32> to vector<8x32xbf16>
    %433 = tpu.concatenate %253, %304, %355, %406 in 1 : vector<8x32xf32>, vector<8x32xf32>, vector<8x32xf32>, vector<8x32xf32> -> vector<8x128xf32>
    %434 = arith.index_cast %c1_i32_46 : i32 to index
    %c0_83 = arith.constant 0 : index
    %c0_84 = arith.constant 0 : index
    %435 = vector.load %arg6[%434, %c0_83, %c0_84] : memref<2x8x128xf32, #tpu.memory_space<vmem>>, vector<1x8x128xf32>
    %436 = vector.shape_cast %435 : vector<1x8x128xf32> to vector<8x128xf32>
    %437 = vector.shape_cast %433 : vector<8x128xf32> to vector<1x8x128xf32>
    tpu.vector_store %arg6[%434, %c0_83, %c0_84], %437 {strides = array<i32>} : memref<2x8x128xf32, #tpu.memory_space<vmem>>, vector<1x8x128xf32>,
    %c2_i32_85 = arith.constant 2 : i32
    %c0_86 = arith.constant 0 : index
    %c0_87 = arith.constant 0 : index
    %438 = vector.load %arg8[%c0_86, %c0_87] : memref<8x32xbf16, #tpu.memory_space<vmem>>, vector<8x32xbf16>
    tpu.vector_store %arg8[%c0_86, %c0_87], %431 {strides = array<i32>} : memref<8x32xbf16, #tpu.memory_space<vmem>>, vector<8x32xbf16>,
    %c0_88 = arith.constant 0 : index
    %c0_89 = arith.constant 0 : index
    %439 = vector.load %arg9[%c0_88, %c0_89] : memref<8x32xf32, #tpu.memory_space<vmem>>, vector<8x32xf32>
    tpu.vector_store %arg9[%c0_88, %c0_89], %424 {strides = array<i32>} : memref<8x32xf32, #tpu.memory_space<vmem>>, vector<8x32xf32>,
    %c0_90 = arith.constant 0 : index
    %c0_91 = arith.constant 0 : index
    %440 = vector.load %arg10[%c0_90, %c0_91] : memref<8x32xbf16, #tpu.memory_space<vmem>>, vector<8x32xbf16>
    tpu.vector_store %arg10[%c0_90, %c0_91], %432 {strides = array<i32>} : memref<8x32xbf16, #tpu.memory_space<vmem>>, vector<8x32xbf16>,
    %c0_92 = arith.constant 0 : index
    %c0_93 = arith.constant 0 : index
    %441 = vector.load %arg11[%c0_92, %c0_93] : memref<8x32xf32, #tpu.memory_space<vmem>>, vector<8x32xf32>
    tpu.vector_store %arg11[%c0_92, %c0_93], %403 {strides = array<i32>} : memref<8x32xf32, #tpu.memory_space<vmem>>, vector<8x32xf32>,
    return
  }
  func.func @transform_0(%arg0: i32, %arg1: i32) -> (i32, i32) {
    %c0_i32 = arith.constant 0 : i32
    %c0_i32_0 = arith.constant 0 : i32
    return %arg0, %c0_i32 : i32, i32
  }
  func.func @transform_1(%arg0: i32, %arg1: i32) -> (i32, i32, i32) {
    %c0_i32 = arith.constant 0 : i32
    %c0_i32_0 = arith.constant 0 : i32
    return %arg1, %arg0, %c0_i32 : i32, i32, i32
  }
  func.func @transform_2(%arg0: i32, %arg1: i32) -> (i32, i32) {
    %c0_i32 = arith.constant 0 : i32
    %c0_i32_0 = arith.constant 0 : i32
    %c0_i32_1 = arith.constant 0 : i32
    return %c0_i32, %c0_i32_0 : i32, i32
  }
  func.func @transform_3(%arg0: i32, %arg1: i32) -> (i32, i32) {
    %c0_i32 = arith.constant 0 : i32
    %c0_i32_0 = arith.constant 0 : i32
    %c0_i32_1 = arith.constant 0 : i32
    return %c0_i32, %c0_i32_0 : i32, i32
  }
  func.func @transform_4(%arg0: i32, %arg1: i32) -> (i32, i32, i32) {
    %c0_i32 = arith.constant 0 : i32
    %c0_i32_0 = arith.constant 0 : i32
    return %arg1, %arg0, %c0_i32 : i32, i32, i32
  }
  func.func @transform_5(%arg0: i32, %arg1: i32) -> (i32, i32, i32) {
    %c0_i32 = arith.constant 0 : i32
    %c0_i32_0 = arith.constant 0 : i32
    %c0_i32_1 = arith.constant 0 : i32
    return %c0_i32, %arg0, %c0_i32_0 : i32, i32, i32
  }
}

</mosaic_0001>

<llo_original>
// kernel: tpu_custom_call.1
$region0: #{tpu_custom_call.1}
  #allocation0 [shape = 'u32[]', space=smem, size = 0x4, offset = 0x4, fixed_abs, tag = 'smem constant byte address 0x4 - core index']
  #allocation1 [shape = 'u32[144,128]{1,0:T(1,128)}', space=vmem, size = 0x12000, scoped, tag = 'internal scratch']
  #allocation2 [shape = 'bf16[8,32]{1,0:T(8,128)(2,1)}', space=vmem, size = 0x800, scoped, tag = 'scratch operand']
  #allocation3 [shape = 'f32[8,32]{1,0:T(8,128)}', space=vmem, size = 0x1000, scoped, tag = 'scratch operand']
  #allocation4 [shape = 'bf16[8,32]{1,0:T(8,128)(2,1)}', space=vmem, size = 0x800, scoped, tag = 'scratch operand']
  #allocation5 [shape = 'f32[8,32]{1,0:T(8,128)}', space=vmem, size = 0x1000, scoped, tag = 'scratch operand']
  %s0 = inlined_call_operand.hbm [shape: f32[8,128], index: 0, kind: input, shape index: {}]
  %s1 = inlined_call_operand.hbm [shape: f32[8,8,128], index: 1, kind: input, shape index: {}]
  %s2 = inlined_call_operand.hbm [shape: bf16[64,256], index: 2, kind: input, shape index: {}]
  %s3 = inlined_call_operand.vmem [shape: f32[1,128], index: 3, kind: input, shape index: {}]
  %s4 = inlined_call_operand.hbm [shape: f32[2,8,128], index: 4, kind: output, shape index: {0}]
  %s5 = inlined_call_operand.hbm [shape: f32[2,8,32], index: 5, kind: output, shape index: {1}]
  %6 = xla_tuple %s4, %s5
  %s7 = sld [smem:[#allocation0]]
  $region82: #{tpu_custom_call.1} parent=0
    _
  %s9 = ssub.s32 1, %s7
  %s10 = scalar_select 0, %s9, %s7
  $region1: #{tpu_custom_call.1} parent=0
    #allocation6 [shape = 'u8[4096]{0}', space=vmem, size = 0x1000, scoped, tag = 'input window, operand 0, single buffered']
    #allocation7 [shape = 's32[1]{0}', space=sflag, size = 0x4, scoped, tag = 'scoped memory for tpu_custom_call.1']
    #allocation8 [shape = 's32[1]{0}', space=sflag, size = 0x4, scoped, tag = 'scoped memory for tpu_custom_call.1']
    #allocation9 [shape = 'u8[32768]{0}', space=vmem, size = 0x8000, scoped, tag = 'input window, operand 1, single buffered']
    #allocation10 [shape = 's32[1]{0}', space=sflag, size = 0x4, scoped, tag = 'scoped memory for tpu_custom_call.1']
    #allocation11 [shape = 'u8[32768]{0}', space=vmem, size = 0x8000, scoped, tag = 'input window, operand 2, single buffered']
    #allocation12 [shape = 'u8[8192]{0}', space=vmem, size = 0x2000, scoped, tag = 'output window, operand 0, single buffered']
    #allocation13 [shape = 'u8[8192]{0}', space=vmem, size = 0x2000, scoped, tag = 'output window, operand 1, single buffered']
    #allocation14 [shape = 's32[1]{0}', space=sflag, size = 0x4, scoped, tag = 'scoped memory for tpu_custom_call.1']
    %11 = vsyncpa [#allocation7], 0
    %12 = vsyncpa [#allocation10], 0
    %13 = vsyncpa [#allocation8], 0
    %14 = vsyncpa [#allocation14], 0
    // Predicated region
    $region2: #{tpu_custom_call.1} parent=1 // pred_check
      _
    $region3: #{tpu_custom_call.1} parent=1 // pred_check_branch
      %16 = sbr.rel (0) target = $region5
    $region4: #{tpu_custom_call.1} parent=1 // pred_region
      %s18 = ssub.s32 128, 128
      %19 = vsyncadd [#allocation7], %s18
      %s21 = sshll.u32 [#allocation6], 4
      %s22 = int_to_ptr.vmem [resolvable:$true] %s21
      %24 = dma.hbm_to_vmem [thread:$0]  %s0, 128, %s22, [#allocation7]
    $region5: #{tpu_custom_call.1} parent=1 // pred_fallthru
      _
    // Predicated region
    $region6: #{tpu_custom_call.1} parent=1 // pred_check
      _
    $region7: #{tpu_custom_call.1} parent=1 // pred_check_branch
      %26 = sbr.rel (0) target = $region9
    $region8: #{tpu_custom_call.1} parent=1 // pred_region
      %s28 = ssub.s32 1024, 1024
      %29 = vsyncadd [#allocation10], %s28
      %s30 = sshll.u32 [#allocation9], 4
      %s31 = int_to_ptr.vmem [resolvable:$true] %s30
      %36 = dma.hbm_to_vmem [thread:$0]  %s1, 1024, %s31, [#allocation10], 128, 128, 8
    $region9: #{tpu_custom_call.1} parent=1 // pred_fallthru
      _
    // Predicated region
    $region10: #{tpu_custom_call.1} parent=1 // pred_check
      _
    $region11: #{tpu_custom_call.1} parent=1 // pred_check_branch
      %38 = sbr.rel (0) target = $region13
    $region12: #{tpu_custom_call.1} parent=1 // pred_region
      %s40 = ssub.s32 1024, 1024
      %41 = vsyncadd [#allocation10], %s40
      %s42 = sshll.u32 [#allocation11], 4
      %s43 = int_to_ptr.vmem [resolvable:$true] %s42
      %48 = dma.hbm_to_vmem [thread:$0]  %s2, 1024, %s43, [#allocation10], 128, 128, 8
    $region13: #{tpu_custom_call.1} parent=1 // pred_fallthru
      _
    // Predicated region
    $region14: #{tpu_custom_call.1} parent=1 // pred_check
      _
    $region15: #{tpu_custom_call.1} parent=1 // pred_check_branch
      %50 = sbr.rel (0) target = $region17
    $region16: #{tpu_custom_call.1} parent=1 // pred_region
      _
    $region17: #{tpu_custom_call.1} parent=1 // pred_fallthru
      _
    // Predicated region
    $region18: #{tpu_custom_call.1} parent=1 // pred_check
      _
    $region19: #{tpu_custom_call.1} parent=1 // pred_check_branch
      %52 = sbr.rel (0) target = $region21
    $region20: #{tpu_custom_call.1} parent=1 // pred_region
      %53 = dma.done [#allocation7], 128
    $region21: #{tpu_custom_call.1} parent=1 // pred_fallthru
      _
    // Predicated region
    $region22: #{tpu_custom_call.1} parent=1 // pred_check
      _
    $region23: #{tpu_custom_call.1} parent=1 // pred_check_branch
      %55 = sbr.rel (0) target = $region25
    $region24: #{tpu_custom_call.1} parent=1 // pred_region
      %56 = dma.done [#allocation10], 1024
    $region25: #{tpu_custom_call.1} parent=1 // pred_fallthru
      _
    // Predicated region
    $region26: #{tpu_custom_call.1} parent=1 // pred_check
      _
    $region27: #{tpu_custom_call.1} parent=1 // pred_check_branch
      %58 = sbr.rel (0) target = $region29
    $region28: #{tpu_custom_call.1} parent=1 // pred_region
      %59 = dma.done [#allocation10], 1024
    $region29: #{tpu_custom_call.1} parent=1 // pred_fallthru
      _
    %v61 = vlaneseq
    %v62 = vand.u32 %v61, 127
    %vm63 = vcmp.ge.s32.totalorder %v62, 64
    %vm64 = vcmp.lt.s32.totalorder %v62, 96
    %vm65 = vmand %vm63, %vm64
    %v66 = vsel %vm65, 1.0, 0.5
    %v67 = vsub.f32 1.0, %v66
    %v68 = vld [vmem:[%s3] sm:$0x1]
    %p69 = scmp.eq.s32.totalorder 0, 0
    // Predicated region
    $region30: #{tpu_custom_call.1} parent=1 // pred_check
      %p70 = pneg %p69
    $region31: #{tpu_custom_call.1} parent=1 // pred_check_branch
      %72 = sbr.rel (%p70) target = $region33
    $region32: #{tpu_custom_call.1} parent=1 // pred_region
      %v73 = vld [vmem:[#allocation6] sm:$0xff]
      %v74 = vmul.f32 %v73, %v66
      %v75 = vtanh.pop %v74
      %v76 = vmul.f32 %v75, %v66
      %v77 = vadd.f32 %v76, %v67
      %v78 = vmul.f32 %v77, 0.0
      %80 = vrot.lane.b32.xlu0 %v77, 64
      %v81 = vpop.permute.xlu0 %80
      %v83 = vmul.f32 %v77, %v81
      %85 = vrot.lane.b32.xlu0 %v83, 32
      %v86 = vpop.permute.xlu0 %85
      %v88 = vadd.f32 %v78, %v86
      %v89 = vtanh.pop %v88
      %91 = vrot.lane.b32.xlu0 %v89, 64
      %v92 = vpop.permute.xlu0 %91
      %v94 = vmul.f32 %v77, %v92
      %v95 = vpack.c.bf16 %v94, %v94
      %v97 = vunpack.c.l.b16 %v95
      %v98 = vpack.c.b16 %v97, %v97
      %99 = vrot.lane.b32.xlu0 %v98, 32
      %v100 = vpop.permute.xlu0 %99
      %vm102 = vcmask 257024
      %103 = vst.msk [vmem:[#allocation2] sm:$0xf] %vm102, %v100
      %105 = vrot.lane.b32.xlu0 %v88, 96
      %v106 = vpop.permute.xlu0 %105
      %vm108 = vcmask 261120
      %109 = vst.msk [vmem:[#allocation3] sm:$0xff] %vm108, %v106
      %110 = vst.msk [vmem:[#allocation4] sm:$0xf] %vm102, 0
      %111 = vst.msk [vmem:[#allocation5] sm:$0xff] %vm108, 0.0
    $region33: #{tpu_custom_call.1} parent=1 // pred_fallthru
      _
    %s112 = smul.u32 0, 8
    %v113 = vld [vmem:[#allocation2] sm:$0xf]
    %v114 = vld [vmem:[#allocation3] sm:$0xff]
    %v115 = vld [vmem:[#allocation4] sm:$0xf]
    %v116 = vld [vmem:[#allocation5] sm:$0xff]
    %v118 = vunpack.c.l.b16 %v115
    %v119 = vpack.c.b16 %v118, %v118
    %120 = vrot.lane.b32.xlu0 %v119, 32
    %v121 = vpop.permute.xlu0 %120
    %vm122 = vcmask 261120
    %v125 = vsel %vm122, %v113, %v121
    %v126 = vld [vmem:[#allocation11] sm:$0xff]
    %v127 = vld [vmem:[#allocation11 + $0x8] sm:$0xff]
    %v128 = vld [vmem:[#allocation11 + $0x10] sm:$0xff]
    %v129 = vld [vmem:[#allocation11 + $0x18] sm:$0xff]
    %v130 = vld [vmem:[#allocation11 + $0x20] sm:$0xff]
    %v131 = vld [vmem:[#allocation11 + $0x28] sm:$0xff]
    %v132 = vld [vmem:[#allocation11 + $0x30] sm:$0xff]
    %v133 = vld [vmem:[#allocation11 + $0x38] sm:$0xff]
    %v142 = vunpack.c.l.b16 %v126
    %v143 = vunpack.c.h.b16 %v126
    %v144 = vunpack.c.l.b16 %v127
    %v145 = vunpack.c.h.b16 %v127
    %v146 = vunpack.c.l.b16 %v128
    %v147 = vunpack.c.h.b16 %v128
    %v148 = vunpack.c.l.b16 %v129
    %v149 = vunpack.c.h.b16 %v129
    %v150 = vunpack.c.l.b16 %v130
    %v151 = vunpack.c.h.b16 %v130
    %v152 = vunpack.c.l.b16 %v131
    %v153 = vunpack.c.h.b16 %v131
    %v154 = vunpack.c.l.b16 %v132
    %v155 = vunpack.c.h.b16 %v132
    %v156 = vunpack.c.l.b16 %v133
    %v157 = vunpack.c.h.b16 %v133
    %v158 = vpack.c.b16 %v144, %v142
    %v159 = vpack.c.b16 %v145, %v143
    %v160 = vpack.c.b16 %v148, %v146
    %v161 = vpack.c.b16 %v149, %v147
    %v162 = vpack.c.b16 %v152, %v150
    %v163 = vpack.c.b16 %v153, %v151
    %v164 = vpack.c.b16 %v156, %v154
    %v165 = vpack.c.b16 %v157, %v155
    %vm174 = vcmask 523264
    %v175 = vsel %vm174, %v125, 0
    %177 = vmatprep.subr.bf16.mxu0 %v159
    %178 = vmatpush1.bf16.msra.mxu0 %v158
    %179 = vmatprep.subr.bf16.mxu0 %v161
    %180 = vmatpush1.bf16.msra.mxu0 %v160
    %181 = vmatprep.subr.bf16.mxu0 %v163
    %182 = vmatpush1.bf16.msra.mxu0 %v162
    %183 = vmatprep.subr.bf16.mxu0 %v165
    %184 = vmatpush1.bf16.msra.mxu0 %v164
    %185 = vmatprep.subr.bf16.mxu0 0
    %186 = vmatpush1.bf16.msra.mxu0 0
    %187 = vmatprep.subr.bf16.mxu0 0
    %188 = vmatpush1.bf16.msra.mxu0 0
    %189 = vmatprep.subr.bf16.mxu0 0
    %190 = vmatpush1.bf16.msra.mxu0 0
    %191 = vmatprep.subr.bf16.mxu0 0
    %192 = vmatpush1.bf16.msra.mxu0 0
    %193 = vmatprep.subr.bf16.mxu0 0
    %194 = vmatpush1.bf16.msra.mxu0 0
    %195 = vmatprep.subr.bf16.mxu0 0
    %196 = vmatpush1.bf16.msra.mxu0 0
    %197 = vmatprep.subr.bf16.mxu0 0
    %198 = vmatpush1.bf16.msra.mxu0 0
    %199 = vmatprep.subr.bf16.mxu0 0
    %200 = vmatpush1.bf16.msra.mxu0 0
    %201 = vmatprep.subr.bf16.mxu0 0
    %202 = vmatpush1.bf16.msra.mxu0 0
    %203 = vmatprep.subr.bf16.mxu0 0
    %204 = vmatpush1.bf16.msra.mxu0 0
    %205 = vmatprep.subr.bf16.mxu0 0
    %206 = vmatpush1.bf16.msra.mxu0 0
    %207 = vmatprep.subr.bf16.mxu0 0
    %208 = vmatpush1.bf16.msra.mxu0 0
    %209 = vmatprep.mubr.bf16.mxu0 0
    %210 = vmatmul.mubr.bf16.gmra.mrb[0].mxu0 %v175
    %v211 = vpop.f32.mrb[0].mxu0
    %v212 = vadd.f32 0.0, %v211
    %v213 = vpop.f32.mrb[0].mxu0
    %v214 = vadd.f32 0.0, %v213
    %v215 = vpop.f32.mrb[0].mxu0
    %v216 = vpop.f32.mrb[0].mxu0
    %217 = vdwg.mxu0
    %v219 = vlaneseq
    %v220 = vshrl.u32 %v219, 7
    %v221 = vsub.s32 0, %v220
    %v222 = vrot.slane %v68, %v221
    %v224 = vadd.f32 %v214, %v222
    %v225 = vmul.f32 %v224, %v66
    %v226 = vtanh.pop %v225
    %v227 = vmul.f32 %v226, %v66
    %v228 = vadd.f32 %v227, %v67
    %230 = vrot.lane.b32.xlu0 %v116, 32
    %v231 = vpop.permute.xlu0 %230
    %v233 = vmul.f32 %v228, %v231
    %235 = vrot.lane.b32.xlu0 %v228, 64
    %v236 = vpop.permute.xlu0 %235
    %v238 = vmul.f32 %v228, %v236
    %240 = vrot.lane.b32.xlu0 %v238, 32
    %v241 = vpop.permute.xlu0 %240
    %v243 = vadd.f32 %v233, %v241
    %v244 = vtanh.pop %v243
    %246 = vrot.lane.b32.xlu0 %v244, 64
    %v247 = vpop.permute.xlu0 %246
    %v249 = vmul.f32 %v228, %v247
    %v250 = vld [vmem:[#allocation9] sm:$0xff]
    %v251 = vadd.f32 %v250, %v212
    %v252 = vmul.f32 %v251, %v66
    %v253 = vtanh.pop %v252
    %v254 = vmul.f32 %v253, %v66
    %v255 = vadd.f32 %v254, %v67
    %257 = vrot.lane.b32.xlu0 %v114, 32
    %v258 = vpop.permute.xlu0 %257
    %v260 = vmul.f32 %v255, %v258
    %262 = vrot.lane.b32.xlu0 %v255, 64
    %v263 = vpop.permute.xlu0 %262
    %v265 = vmul.f32 %v255, %v263
    %267 = vrot.lane.b32.xlu0 %v265, 32
    %v268 = vpop.permute.xlu0 %267
    %v270 = vadd.f32 %v260, %v268
    %v271 = vtanh.pop %v270
    %273 = vrot.lane.b32.xlu0 %v271, 64
    %v274 = vpop.permute.xlu0 %273
    %v276 = vmul.f32 %v255, %v274
    %p277 = scmp.eq.s32.totalorder %s112, 7
    // Predicated region
    $region34: #{tpu_custom_call.1} parent=1 // pred_check
      %p278 = pneg %p277
    $region35: #{tpu_custom_call.1} parent=1 // pred_check_branch
      %280 = sbr.rel (%p278) target = $region37
    $region36: #{tpu_custom_call.1} parent=1 // pred_region
      %v281 = vunpack.c.l.bf16 %v113
      %282 = vst.msk [vmem:[#allocation13] sm:$0xff] %vm122, %v281
      %284 = vrot.lane.b32.xlu0 %v249, 32
      %v285 = vpop.permute.xlu0 %284
      %s287 = scalar_lea.vmem [#allocation13], 8
      %288 = vst.msk [vmem:[%s287] sm:$0xff] %vm122, %v285
    $region37: #{tpu_custom_call.1} parent=1 // pred_fallthru
      _
    %v289 = vpack.c.bf16 %v276, %v276
    %v290 = vpack.c.bf16 %v249, %v249
    %s291 = sadd.s32 %s112, 1
    %293 = vrot.lane.b32.xlu0 %v289, 32
    %v294 = vpop.permute.xlu0 %293
    %296 = vrot.lane.b32.xlu0 %v290, 64
    %v297 = vpop.permute.xlu0 %296
    %v300 = vsel %vm122, %v294, %v297
    %v301 = vld [vmem:[#allocation11] sm:$0xff]
    %v302 = vld [vmem:[#allocation11 + $0x8] sm:$0xff]
    %v303 = vld [vmem:[#allocation11 + $0x10] sm:$0xff]
    %v304 = vld [vmem:[#allocation11 + $0x18] sm:$0xff]
    %v305 = vld [vmem:[#allocation11 + $0x20] sm:$0xff]
    %v306 = vld [vmem:[#allocation11 + $0x28] sm:$0xff]
    %v307 = vld [vmem:[#allocation11 + $0x30] sm:$0xff]
    %v308 = vld [vmem:[#allocation11 + $0x38] sm:$0xff]
    %v317 = vunpack.c.l.b16 %v301
    %v318 = vunpack.c.h.b16 %v301
    %v319 = vunpack.c.l.b16 %v302
    %v320 = vunpack.c.h.b16 %v302
    %v321 = vunpack.c.l.b16 %v303
    %v322 = vunpack.c.h.b16 %v303
    %v323 = vunpack.c.l.b16 %v304
    %v324 = vunpack.c.h.b16 %v304
    %v325 = vunpack.c.l.b16 %v305
    %v326 = vunpack.c.h.b16 %v305
    %v327 = vunpack.c.l.b16 %v306
    %v328 = vunpack.c.h.b16 %v306
    %v329 = vunpack.c.l.b16 %v307
    %v330 = vunpack.c.h.b16 %v307
    %v331 = vunpack.c.l.b16 %v308
    %v332 = vunpack.c.h.b16 %v308
    %v333 = vpack.c.b16 %v319, %v317
    %v334 = vpack.c.b16 %v320, %v318
    %v335 = vpack.c.b16 %v323, %v321
    %v336 = vpack.c.b16 %v324, %v322
    %v337 = vpack.c.b16 %v327, %v325
    %v338 = vpack.c.b16 %v328, %v326
    %v339 = vpack.c.b16 %v331, %v329
    %v340 = vpack.c.b16 %v332, %v330
    %v349 = vsel %vm174, %v300, 0
    %351 = vmatprep.subr.bf16.mxu0 %v334
    %352 = vmatpush1.bf16.msra.mxu0 %v333
    %353 = vmatprep.subr.bf16.mxu0 %v336
    %354 = vmatpush1.bf16.msra.mxu0 %v335
    %355 = vmatprep.subr.bf16.mxu0 %v338
    %356 = vmatpush1.bf16.msra.mxu0 %v337
    %357 = vmatprep.subr.bf16.mxu0 %v340
    %358 = vmatpush1.bf16.msra.mxu0 %v339
    %359 = vmatprep.subr.bf16.mxu0 0
    %360 = vmatpush1.bf16.msra.mxu0 0
    %361 = vmatprep.subr.bf16.mxu0 0
    %362 = vmatpush1.bf16.msra.mxu0 0
    %363 = vmatprep.subr.bf16.mxu0 0
    %364 = vmatpush1.bf16.msra.mxu0 0
    %365 = vmatprep.subr.bf16.mxu0 0
    %366 = vmatpush1.bf16.msra.mxu0 0
    %367 = vmatprep.subr.bf16.mxu0 0
    %368 = vmatpush1.bf16.msra.mxu0 0
    %369 = vmatprep.subr.bf16.mxu0 0
    %370 = vmatpush1.bf16.msra.mxu0 0
    %371 = vmatprep.subr.bf16.mxu0 0
    %372 = vmatpush1.bf16.msra.mxu0 0
    %373 = vmatprep.subr.bf16.mxu0 0
    %374 = vmatpush1.bf16.msra.mxu0 0
    %375 = vmatprep.subr.bf16.mxu0 0
    %376 = vmatpush1.bf16.msra.mxu0 0
    %377 = vmatprep.subr.bf16.mxu0 0
    %378 = vmatpush1.bf16.msra.mxu0 0
    %379 = vmatprep.subr.bf16.mxu0 0
    %380 = vmatpush1.bf16.msra.mxu0 0
    %381 = vmatprep.subr.bf16.mxu0 0
    %382 = vmatpush1.bf16.msra.mxu0 0
    %383 = vmatprep.mubr.bf16.mxu0 0
    %384 = vmatmul.mubr.bf16.gmra.mrb[0].mxu0 %v349
    %v385 = vpop.f32.mrb[0].mxu0
    %v386 = vadd.f32 0.0, %v385
    %v387 = vpop.f32.mrb[0].mxu0
    %v388 = vadd.f32 0.0, %v387
    %v389 = vpop.f32.mrb[0].mxu0
    %v390 = vpop.f32.mrb[0].mxu0
    %391 = vdwg.mxu0
    %v392 = vadd.f32 %v388, %v222
    %v393 = vmul.f32 %v392, %v66
    %v394 = vtanh.pop %v393
    %v395 = vmul.f32 %v394, %v66
    %v396 = vadd.f32 %v395, %v67
    %v397 = vmul.f32 %v396, %v243
    %399 = vrot.lane.b32.xlu0 %v396, 64
    %v400 = vpop.permute.xlu0 %399
    %v402 = vmul.f32 %v396, %v400
    %404 = vrot.lane.b32.xlu0 %v402, 32
    %v405 = vpop.permute.xlu0 %404
    %v407 = vadd.f32 %v397, %v405
    %v408 = vtanh.pop %v407
    %410 = vrot.lane.b32.xlu0 %v408, 64
    %v411 = vpop.permute.xlu0 %410
    %v413 = vmul.f32 %v396, %v411
    %s414 = scalar_lea.vmem [#allocation9], 8
    %v415 = vld [vmem:[%s414] sm:$0xff]
    %v416 = vadd.f32 %v415, %v386
    %v417 = vmul.f32 %v416, %v66
    %v418 = vtanh.pop %v417
    %v419 = vmul.f32 %v418, %v66
    %v420 = vadd.f32 %v419, %v67
    %v421 = vmul.f32 %v420, %v270
    %423 = vrot.lane.b32.xlu0 %v420, 64
    %v424 = vpop.permute.xlu0 %423
    %v426 = vmul.f32 %v420, %v424
    %428 = vrot.lane.b32.xlu0 %v426, 32
    %v429 = vpop.permute.xlu0 %428
    %v431 = vadd.f32 %v421, %v429
    %v432 = vtanh.pop %v431
    %434 = vrot.lane.b32.xlu0 %v432, 64
    %v435 = vpop.permute.xlu0 %434
    %v437 = vmul.f32 %v420, %v435
    %p438 = scmp.eq.s32.totalorder %s291, 7
    // Predicated region
    $region38: #{tpu_custom_call.1} parent=1 // pred_check
      %p439 = pneg %p438
    $region39: #{tpu_custom_call.1} parent=1 // pred_check_branch
      %441 = sbr.rel (%p439) target = $region41
    $region40: #{tpu_custom_call.1} parent=1 // pred_region
      %v442 = vunpack.c.l.bf16 %v289
      %444 = vrot.lane.b32.xlu0 %v442, 32
      %v445 = vpop.permute.xlu0 %444
      %447 = vst.msk [vmem:[#allocation13] sm:$0xff] %vm122, %v445
      %449 = vrot.lane.b32.xlu0 %v413, 32
      %v450 = vpop.permute.xlu0 %449
      %s452 = scalar_lea.vmem [#allocation13], 8
      %453 = vst.msk [vmem:[%s452] sm:$0xff] %vm122, %v450
    $region41: #{tpu_custom_call.1} parent=1 // pred_fallthru
      _
    %v454 = vpack.c.bf16 %v437, %v437
    %v455 = vpack.c.bf16 %v413, %v413
    %s456 = sadd.s32 %s112, 2
    %458 = vrot.lane.b32.xlu0 %v454, 32
    %v459 = vpop.permute.xlu0 %458
    %461 = vrot.lane.b32.xlu0 %v455, 64
    %v462 = vpop.permute.xlu0 %461
    %v465 = vsel %vm122, %v459, %v462
    %v466 = vld [vmem:[#allocation11] sm:$0xff]
    %v467 = vld [vmem:[#allocation11 + $0x8] sm:$0xff]
    %v468 = vld [vmem:[#allocation11 + $0x10] sm:$0xff]
    %v469 = vld [vmem:[#allocation11 + $0x18] sm:$0xff]
    %v470 = vld [vmem:[#allocation11 + $0x20] sm:$0xff]
    %v471 = vld [vmem:[#allocation11 + $0x28] sm:$0xff]
    %v472 = vld [vmem:[#allocation11 + $0x30] sm:$0xff]
    %v473 = vld [vmem:[#allocation11 + $0x38] sm:$0xff]
    %v482 = vunpack.c.l.b16 %v466
    %v483 = vunpack.c.h.b16 %v466
    %v484 = vunpack.c.l.b16 %v467
    %v485 = vunpack.c.h.b16 %v467
    %v486 = vunpack.c.l.b16 %v468
    %v487 = vunpack.c.h.b16 %v468
    %v488 = vunpack.c.l.b16 %v469
    %v489 = vunpack.c.h.b16 %v469
    %v490 = vunpack.c.l.b16 %v470
    %v491 = vunpack.c.h.b16 %v470
    %v492 = vunpack.c.l.b16 %v471
    %v493 = vunpack.c.h.b16 %v471
    %v494 = vunpack.c.l.b16 %v472
    %v495 = vunpack.c.h.b16 %v472
    %v496 = vunpack.c.l.b16 %v473
    %v497 = vunpack.c.h.b16 %v473
    %v498 = vpack.c.b16 %v484, %v482
    %v499 = vpack.c.b16 %v485, %v483
    %v500 = vpack.c.b16 %v488, %v486
    %v501 = vpack.c.b16 %v489, %v487
    %v502 = vpack.c.b16 %v492, %v490
    %v503 = vpack.c.b16 %v493, %v491
    %v504 = vpack.c.b16 %v496, %v494
    %v505 = vpack.c.b16 %v497, %v495
    %v514 = vsel %vm174, %v465, 0
    %516 = vmatprep.subr.bf16.mxu0 %v499
    %517 = vmatpush1.bf16.msra.mxu0 %v498
    %518 = vmatprep.subr.bf16.mxu0 %v501
    %519 = vmatpush1.bf16.msra.mxu0 %v500
    %520 = vmatprep.subr.bf16.mxu0 %v503
    %521 = vmatpush1.bf16.msra.mxu0 %v502
    %522 = vmatprep.subr.bf16.mxu0 %v505
    %523 = vmatpush1.bf16.msra.mxu0 %v504
    %524 = vmatprep.subr.bf16.mxu0 0
    %525 = vmatpush1.bf16.msra.mxu0 0
    %526 = vmatprep.subr.bf16.mxu0 0
    %527 = vmatpush1.bf16.msra.mxu0 0
    %528 = vmatprep.subr.bf16.mxu0 0
    %529 = vmatpush1.bf16.msra.mxu0 0
    %530 = vmatprep.subr.bf16.mxu0 0
    %531 = vmatpush1.bf16.msra.mxu0 0
    %532 = vmatprep.subr.bf16.mxu0 0
    %533 = vmatpush1.bf16.msra.mxu0 0
    %534 = vmatprep.subr.bf16.mxu0 0
    %535 = vmatpush1.bf16.msra.mxu0 0
    %536 = vmatprep.subr.bf16.mxu0 0
    %537 = vmatpush1.bf16.msra.mxu0 0
    %538 = vmatprep.subr.bf16.mxu0 0
    %539 = vmatpush1.bf16.msra.mxu0 0
    %540 = vmatprep.subr.bf16.mxu0 0
    %541 = vmatpush1.bf16.msra.mxu0 0
    %542 = vmatprep.subr.bf16.mxu0 0
    %543 = vmatpush1.bf16.msra.mxu0 0
    %544 = vmatprep.subr.bf16.mxu0 0
    %545 = vmatpush1.bf16.msra.mxu0 0
    %546 = vmatprep.subr.bf16.mxu0 0
    %547 = vmatpush1.bf16.msra.mxu0 0
    %548 = vmatprep.mubr.bf16.mxu0 0
    %549 = vmatmul.mubr.bf16.gmra.mrb[0].mxu0 %v514
    %v550 = vpop.f32.mrb[0].mxu0
    %v551 = vadd.f32 0.0, %v550
    %v552 = vpop.f32.mrb[0].mxu0
    %v553 = vadd.f32 0.0, %v552
    %v554 = vpop.f32.mrb[0].mxu0
    %v555 = vpop.f32.mrb[0].mxu0
    %556 = vdwg.mxu0
    %v557 = vadd.f32 %v553, %v222
    %v558 = vmul.f32 %v557, %v66
    %v559 = vtanh.pop %v558
    %v560 = vmul.f32 %v559, %v66
    %v561 = vadd.f32 %v560, %v67
    %v562 = vmul.f32 %v561, %v407
    %564 = vrot.lane.b32.xlu0 %v561, 64
    %v565 = vpop.permute.xlu0 %564
    %v567 = vmul.f32 %v561, %v565
    %569 = vrot.lane.b32.xlu0 %v567, 32
    %v570 = vpop.permute.xlu0 %569
    %v572 = vadd.f32 %v562, %v570
    %v573 = vtanh.pop %v572
    %575 = vrot.lane.b32.xlu0 %v573, 64
    %v576 = vpop.permute.xlu0 %575
    %v578 = vmul.f32 %v561, %v576
    %s579 = scalar_lea.vmem [#allocation9], 16
    %v580 = vld [vmem:[%s579] sm:$0xff]
    %v581 = vadd.f32 %v580, %v551
    %v582 = vmul.f32 %v581, %v66
    %v583 = vtanh.pop %v582
    %v584 = vmul.f32 %v583, %v66
    %v585 = vadd.f32 %v584, %v67
    %v586 = vmul.f32 %v585, %v431
    %588 = vrot.lane.b32.xlu0 %v585, 64
    %v589 = vpop.permute.xlu0 %588
    %v591 = vmul.f32 %v585, %v589
    %593 = vrot.lane.b32.xlu0 %v591, 32
    %v594 = vpop.permute.xlu0 %593
    %v596 = vadd.f32 %v586, %v594
    %v597 = vtanh.pop %v596
    %599 = vrot.lane.b32.xlu0 %v597, 64
    %v600 = vpop.permute.xlu0 %599
    %v602 = vmul.f32 %v585, %v600
    %p603 = scmp.eq.s32.totalorder %s456, 7
    // Predicated region
    $region42: #{tpu_custom_call.1} parent=1 // pred_check
      %p604 = pneg %p603
    $region43: #{tpu_custom_call.1} parent=1 // pred_check_branch
      %606 = sbr.rel (%p604) target = $region45
    $region44: #{tpu_custom_call.1} parent=1 // pred_region
      %v607 = vunpack.c.l.bf16 %v454
      %609 = vrot.lane.b32.xlu0 %v607, 32
      %v610 = vpop.permute.xlu0 %609
      %612 = vst.msk [vmem:[#allocation13] sm:$0xff] %vm122, %v610
      %614 = vrot.lane.b32.xlu0 %v578, 32
      %v615 = vpop.permute.xlu0 %614
      %s617 = scalar_lea.vmem [#allocation13], 8
      %618 = vst.msk [vmem:[%s617] sm:$0xff] %vm122, %v615
    $region45: #{tpu_custom_call.1} parent=1 // pred_fallthru
      _
    %v619 = vpack.c.bf16 %v602, %v602
    %v620 = vpack.c.bf16 %v578, %v578
    %s621 = sadd.s32 %s112, 3
    %623 = vrot.lane.b32.xlu0 %v619, 32
    %v624 = vpop.permute.xlu0 %623
    %626 = vrot.lane.b32.xlu0 %v620, 64
    %v627 = vpop.permute.xlu0 %626
    %v630 = vsel %vm122, %v624, %v627
    %v631 = vld [vmem:[#allocation11] sm:$0xff]
    %v632 = vld [vmem:[#allocation11 + $0x8] sm:$0xff]
    %v633 = vld [vmem:[#allocation11 + $0x10] sm:$0xff]
    %v634 = vld [vmem:[#allocation11 + $0x18] sm:$0xff]
    %v635 = vld [vmem:[#allocation11 + $0x20] sm:$0xff]
    %v636 = vld [vmem:[#allocation11 + $0x28] sm:$0xff]
    %v637 = vld [vmem:[#allocation11 + $0x30] sm:$0xff]
    %v638 = vld [vmem:[#allocation11 + $0x38] sm:$0xff]
    %v647 = vunpack.c.l.b16 %v631
    %v648 = vunpack.c.h.b16 %v631
    %v649 = vunpack.c.l.b16 %v632
    %v650 = vunpack.c.h.b16 %v632
    %v651 = vunpack.c.l.b16 %v633
    %v652 = vunpack.c.h.b16 %v633
    %v653 = vunpack.c.l.b16 %v634
    %v654 = vunpack.c.h.b16 %v634
    %v655 = vunpack.c.l.b16 %v635
    %v656 = vunpack.c.h.b16 %v635
    %v657 = vunpack.c.l.b16 %v636
    %v658 = vunpack.c.h.b16 %v636
    %v659 = vunpack.c.l.b16 %v637
    %v660 = vunpack.c.h.b16 %v637
    %v661 = vunpack.c.l.b16 %v638
    %v662 = vunpack.c.h.b16 %v638
    %v663 = vpack.c.b16 %v649, %v647
    %v664 = vpack.c.b16 %v650, %v648
    %v665 = vpack.c.b16 %v653, %v651
    %v666 = vpack.c.b16 %v654, %v652
    %v667 = vpack.c.b16 %v657, %v655
    %v668 = vpack.c.b16 %v658, %v656
    %v669 = vpack.c.b16 %v661, %v659
    %v670 = vpack.c.b16 %v662, %v660
    %v679 = vsel %vm174, %v630, 0
    %681 = vmatprep.subr.bf16.mxu0 %v664
    %682 = vmatpush1.bf16.msra.mxu0 %v663
    %683 = vmatprep.subr.bf16.mxu0 %v666
    %684 = vmatpush1.bf16.msra.mxu0 %v665
    %685 = vmatprep.subr.bf16.mxu0 %v668
    %686 = vmatpush1.bf16.msra.mxu0 %v667
    %687 = vmatprep.subr.bf16.mxu0 %v670
    %688 = vmatpush1.bf16.msra.mxu0 %v669
    %689 = vmatprep.subr.bf16.mxu0 0
    %690 = vmatpush1.bf16.msra.mxu0 0
    %691 = vmatprep.subr.bf16.mxu0 0
    %692 = vmatpush1.bf16.msra.mxu0 0
    %693 = vmatprep.subr.bf16.mxu0 0
    %694 = vmatpush1.bf16.msra.mxu0 0
    %695 = vmatprep.subr.bf16.mxu0 0
    %696 = vmatpush1.bf16.msra.mxu0 0
    %697 = vmatprep.subr.bf16.mxu0 0
    %698 = vmatpush1.bf16.msra.mxu0 0
    %699 = vmatprep.subr.bf16.mxu0 0
    %700 = vmatpush1.bf16.msra.mxu0 0
    %701 = vmatprep.subr.bf16.mxu0 0
    %702 = vmatpush1.bf16.msra.mxu0 0
    %703 = vmatprep.subr.bf16.mxu0 0
    %704 = vmatpush1.bf16.msra.mxu0 0
    %705 = vmatprep.subr.bf16.mxu0 0
    %706 = vmatpush1.bf16.msra.mxu0 0
    %707 = vmatprep.subr.bf16.mxu0 0
    %708 = vmatpush1.bf16.msra.mxu0 0
    %709 = vmatprep.subr.bf16.mxu0 0
    %710 = vmatpush1.bf16.msra.mxu0 0
    %711 = vmatprep.subr.bf16.mxu0 0
    %712 = vmatpush1.bf16.msra.mxu0 0
    %713 = vmatprep.mubr.bf16.mxu0 0
    %714 = vmatmul.mubr.bf16.gmra.mrb[0].mxu0 %v679
    %v715 = vpop.f32.mrb[0].mxu0
    %v716 = vadd.f32 0.0, %v715
    %v717 = vpop.f32.mrb[0].mxu0
    %v718 = vadd.f32 0.0, %v717
    %v719 = vpop.f32.mrb[0].mxu0
    %v720 = vpop.f32.mrb[0].mxu0
    %721 = vdwg.mxu0
    %v722 = vadd.f32 %v718, %v222
    %v723 = vmul.f32 %v722, %v66
    %v724 = vtanh.pop %v723
    %v725 = vmul.f32 %v724, %v66
    %v726 = vadd.f32 %v725, %v67
    %v727 = vmul.f32 %v726, %v572
    %729 = vrot.lane.b32.xlu0 %v726, 64
    %v730 = vpop.permute.xlu0 %729
    %v732 = vmul.f32 %v726, %v730
    %734 = vrot.lane.b32.xlu0 %v732, 32
    %v735 = vpop.permute.xlu0 %734
    %v737 = vadd.f32 %v727, %v735
    %v738 = vtanh.pop %v737
    %740 = vrot.lane.b32.xlu0 %v738, 64
    %v741 = vpop.permute.xlu0 %740
    %v743 = vmul.f32 %v726, %v741
    %s744 = scalar_lea.vmem [#allocation9], 24
    %v745 = vld [vmem:[%s744] sm:$0xff]
    %v746 = vadd.f32 %v745, %v716
    %v747 = vmul.f32 %v746, %v66
    %v748 = vtanh.pop %v747
    %v749 = vmul.f32 %v748, %v66
    %v750 = vadd.f32 %v749, %v67
    %v751 = vmul.f32 %v750, %v596
    %753 = vrot.lane.b32.xlu0 %v750, 64
    %v754 = vpop.permute.xlu0 %753
    %v756 = vmul.f32 %v750, %v754
    %758 = vrot.lane.b32.xlu0 %v756, 32
    %v759 = vpop.permute.xlu0 %758
    %v761 = vadd.f32 %v751, %v759
    %v762 = vtanh.pop %v761
    %764 = vrot.lane.b32.xlu0 %v762, 64
    %v765 = vpop.permute.xlu0 %764
    %v767 = vmul.f32 %v750, %v765
    %p768 = scmp.eq.s32.totalorder %s621, 7
    // Predicated region
    $region46: #{tpu_custom_call.1} parent=1 // pred_check
      %p769 = pneg %p768
    $region47: #{tpu_custom_call.1} parent=1 // pred_check_branch
      %771 = sbr.rel (%p769) target = $region49
    $region48: #{tpu_custom_call.1} parent=1 // pred_region
      %v772 = vunpack.c.l.bf16 %v619
      %774 = vrot.lane.b32.xlu0 %v772, 32
      %v775 = vpop.permute.xlu0 %774
      %777 = vst.msk [vmem:[#allocation13] sm:$0xff] %vm122, %v775
      %779 = vrot.lane.b32.xlu0 %v743, 32
      %v780 = vpop.permute.xlu0 %779
      %s782 = scalar_lea.vmem [#allocation13], 8
      %783 = vst.msk [vmem:[%s782] sm:$0xff] %vm122, %v780
    $region49: #{tpu_custom_call.1} parent=1 // pred_fallthru
      _
    %v784 = vpack.c.bf16 %v767, %v767
    %v785 = vpack.c.bf16 %v743, %v743
    %787 = vrot.lane.b32.xlu0 %v249, 32
    %v788 = vpop.permute.xlu0 %787
    %791 = vrot.lane.b32.xlu0 %v413, 64
    %v792 = vpop.permute.xlu0 %791
    %795 = vrot.lane.b32.xlu0 %v578, 96
    %v796 = vpop.permute.xlu0 %795
    %v798 = vsel %vm122, %v788, %v792
    %v799 = vsel %vm174, %v798, %v796
    %vm800 = vcmask 785408
    %v801 = vsel %vm800, %v799, %v743
    %802 = vst [vmem:[#allocation12] sm:$0xff] %v801
    %s803 = sadd.s32 %s112, 4
    %805 = vrot.lane.b32.xlu0 %v784, 32
    %v806 = vpop.permute.xlu0 %805
    %808 = vrot.lane.b32.xlu0 %v785, 64
    %v809 = vpop.permute.xlu0 %808
    %v812 = vsel %vm122, %v806, %v809
    %v813 = vld [vmem:[#allocation11] sm:$0xff]
    %v814 = vld [vmem:[#allocation11 + $0x8] sm:$0xff]
    %v815 = vld [vmem:[#allocation11 + $0x10] sm:$0xff]
    %v816 = vld [vmem:[#allocation11 + $0x18] sm:$0xff]
    %v817 = vld [vmem:[#allocation11 + $0x20] sm:$0xff]
    %v818 = vld [vmem:[#allocation11 + $0x28] sm:$0xff]
    %v819 = vld [vmem:[#allocation11 + $0x30] sm:$0xff]
    %v820 = vld [vmem:[#allocation11 + $0x38] sm:$0xff]
    %v829 = vunpack.c.l.b16 %v813
    %v830 = vunpack.c.h.b16 %v813
    %v831 = vunpack.c.l.b16 %v814
    %v832 = vunpack.c.h.b16 %v814
    %v833 = vunpack.c.l.b16 %v815
    %v834 = vunpack.c.h.b16 %v815
    %v835 = vunpack.c.l.b16 %v816
    %v836 = vunpack.c.h.b16 %v816
    %v837 = vunpack.c.l.b16 %v817
    %v838 = vunpack.c.h.b16 %v817
    %v839 = vunpack.c.l.b16 %v818
    %v840 = vunpack.c.h.b16 %v818
    %v841 = vunpack.c.l.b16 %v819
    %v842 = vunpack.c.h.b16 %v819
    %v843 = vunpack.c.l.b16 %v820
    %v844 = vunpack.c.h.b16 %v820
    %v845 = vpack.c.b16 %v831, %v829
    %v846 = vpack.c.b16 %v832, %v830
    %v847 = vpack.c.b16 %v835, %v833
    %v848 = vpack.c.b16 %v836, %v834
    %v849 = vpack.c.b16 %v839, %v837
    %v850 = vpack.c.b16 %v840, %v838
    %v851 = vpack.c.b16 %v843, %v841
    %v852 = vpack.c.b16 %v844, %v842
    %v861 = vsel %vm174, %v812, 0
    %863 = vmatprep.subr.bf16.mxu0 %v846
    %864 = vmatpush1.bf16.msra.mxu0 %v845
    %865 = vmatprep.subr.bf16.mxu0 %v848
    %866 = vmatpush1.bf16.msra.mxu0 %v847
    %867 = vmatprep.subr.bf16.mxu0 %v850
    %868 = vmatpush1.bf16.msra.mxu0 %v849
    %869 = vmatprep.subr.bf16.mxu0 %v852
    %870 = vmatpush1.bf16.msra.mxu0 %v851
    %871 = vmatprep.subr.bf16.mxu0 0
    %872 = vmatpush1.bf16.msra.mxu0 0
    %873 = vmatprep.subr.bf16.mxu0 0
    %874 = vmatpush1.bf16.msra.mxu0 0
    %875 = vmatprep.subr.bf16.mxu0 0
    %876 = vmatpush1.bf16.msra.mxu0 0
    %877 = vmatprep.subr.bf16.mxu0 0
    %878 = vmatpush1.bf16.msra.mxu0 0
    %879 = vmatprep.subr.bf16.mxu0 0
    %880 = vmatpush1.bf16.msra.mxu0 0
    %881 = vmatprep.subr.bf16.mxu0 0
    %882 = vmatpush1.bf16.msra.mxu0 0
    %883 = vmatprep.subr.bf16.mxu0 0
    %884 = vmatpush1.bf16.msra.mxu0 0
    %885 = vmatprep.subr.bf16.mxu0 0
    %886 = vmatpush1.bf16.msra.mxu0 0
    %887 = vmatprep.subr.bf16.mxu0 0
    %888 = vmatpush1.bf16.msra.mxu0 0
    %889 = vmatprep.subr.bf16.mxu0 0
    %890 = vmatpush1.bf16.msra.mxu0 0
    %891 = vmatprep.subr.bf16.mxu0 0
    %892 = vmatpush1.bf16.msra.mxu0 0
    %893 = vmatprep.subr.bf16.mxu0 0
    %894 = vmatpush1.bf16.msra.mxu0 0
    %895 = vmatprep.mubr.bf16.mxu0 0
    %896 = vmatmul.mubr.bf16.gmra.mrb[0].mxu0 %v861
    %v897 = vpop.f32.mrb[0].mxu0
    %v898 = vadd.f32 0.0, %v897
    %v899 = vpop.f32.mrb[0].mxu0
    %v900 = vadd.f32 0.0, %v899
    %v901 = vpop.f32.mrb[0].mxu0
    %v902 = vpop.f32.mrb[0].mxu0
    %903 = vdwg.mxu0
    %v904 = vadd.f32 %v900, %v222
    %v905 = vmul.f32 %v904, %v66
    %v906 = vtanh.pop %v905
    %v907 = vmul.f32 %v906, %v66
    %v908 = vadd.f32 %v907, %v67
    %v909 = vmul.f32 %v908, %v737
    %911 = vrot.lane.b32.xlu0 %v908, 64
    %v912 = vpop.permute.xlu0 %911
    %v914 = vmul.f32 %v908, %v912
    %916 = vrot.lane.b32.xlu0 %v914, 32
    %v917 = vpop.permute.xlu0 %916
    %v919 = vadd.f32 %v909, %v917
    %v920 = vtanh.pop %v919
    %922 = vrot.lane.b32.xlu0 %v920, 64
    %v923 = vpop.permute.xlu0 %922
    %v925 = vmul.f32 %v908, %v923
    %s926 = scalar_lea.vmem [#allocation9], 32
    %v927 = vld [vmem:[%s926] sm:$0xff]
    %v928 = vadd.f32 %v927, %v898
    %v929 = vmul.f32 %v928, %v66
    %v930 = vtanh.pop %v929
    %v931 = vmul.f32 %v930, %v66
    %v932 = vadd.f32 %v931, %v67
    %v933 = vmul.f32 %v932, %v761
    %935 = vrot.lane.b32.xlu0 %v932, 64
    %v936 = vpop.permute.xlu0 %935
    %v938 = vmul.f32 %v932, %v936
    %940 = vrot.lane.b32.xlu0 %v938, 32
    %v941 = vpop.permute.xlu0 %940
    %v943 = vadd.f32 %v933, %v941
    %v944 = vtanh.pop %v943
    %946 = vrot.lane.b32.xlu0 %v944, 64
    %v947 = vpop.permute.xlu0 %946
    %v949 = vmul.f32 %v932, %v947
    %p950 = scmp.eq.s32.totalorder %s803, 7
    // Predicated region
    $region50: #{tpu_custom_call.1} parent=1 // pred_check
      %p951 = pneg %p950
    $region51: #{tpu_custom_call.1} parent=1 // pred_check_branch
      %953 = sbr.rel (%p951) target = $region53
    $region52: #{tpu_custom_call.1} parent=1 // pred_region
      %v954 = vunpack.c.l.bf16 %v784
      %956 = vrot.lane.b32.xlu0 %v954, 32
      %v957 = vpop.permute.xlu0 %956
      %959 = vst.msk [vmem:[#allocation13] sm:$0xff] %vm122, %v957
      %961 = vrot.lane.b32.xlu0 %v925, 32
      %v962 = vpop.permute.xlu0 %961
      %s964 = scalar_lea.vmem [#allocation13], 8
      %965 = vst.msk [vmem:[%s964] sm:$0xff] %vm122, %v962
    $region53: #{tpu_custom_call.1} parent=1 // pred_fallthru
      _
    %v966 = vpack.c.bf16 %v949, %v949
    %v967 = vpack.c.bf16 %v925, %v925
    %s968 = sadd.s32 %s112, 5
    %970 = vrot.lane.b32.xlu0 %v966, 32
    %v971 = vpop.permute.xlu0 %970
    %973 = vrot.lane.b32.xlu0 %v967, 64
    %v974 = vpop.permute.xlu0 %973
    %v977 = vsel %vm122, %v971, %v974
    %v978 = vld [vmem:[#allocation11] sm:$0xff]
    %v979 = vld [vmem:[#allocation11 + $0x8] sm:$0xff]
    %v980 = vld [vmem:[#allocation11 + $0x10] sm:$0xff]
    %v981 = vld [vmem:[#allocation11 + $0x18] sm:$0xff]
    %v982 = vld [vmem:[#allocation11 + $0x20] sm:$0xff]
    %v983 = vld [vmem:[#allocation11 + $0x28] sm:$0xff]
    %v984 = vld [vmem:[#allocation11 + $0x30] sm:$0xff]
    %v985 = vld [vmem:[#allocation11 + $0x38] sm:$0xff]
    %v994 = vunpack.c.l.b16 %v978
    %v995 = vunpack.c.h.b16 %v978
    %v996 = vunpack.c.l.b16 %v979
    %v997 = vunpack.c.h.b16 %v979
    %v998 = vunpack.c.l.b16 %v980
    %v999 = vunpack.c.h.b16 %v980
    %v1000 = vunpack.c.l.b16 %v981
    %v1001 = vunpack.c.h.b16 %v981
    %v1002 = vunpack.c.l.b16 %v982
    %v1003 = vunpack.c.h.b16 %v982
    %v1004 = vunpack.c.l.b16 %v983
    %v1005 = vunpack.c.h.b16 %v983
    %v1006 = vunpack.c.l.b16 %v984
    %v1007 = vunpack.c.h.b16 %v984
    %v1008 = vunpack.c.l.b16 %v985
    %v1009 = vunpack.c.h.b16 %v985
    %v1010 = vpack.c.b16 %v996, %v994
    %v1011 = vpack.c.b16 %v997, %v995
    %v1012 = vpack.c.b16 %v1000, %v998
    %v1013 = vpack.c.b16 %v1001, %v999
    %v1014 = vpack.c.b16 %v1004, %v1002
    %v1015 = vpack.c.b16 %v1005, %v1003
    %v1016 = vpack.c.b16 %v1008, %v1006
    %v1017 = vpack.c.b16 %v1009, %v1007
    %v1026 = vsel %vm174, %v977, 0
    %1028 = vmatprep.subr.bf16.mxu0 %v1011
    %1029 = vmatpush1.bf16.msra.mxu0 %v1010
    %1030 = vmatprep.subr.bf16.mxu0 %v1013
    %1031 = vmatpush1.bf16.msra.mxu0 %v1012
    %1032 = vmatprep.subr.bf16.mxu0 %v1015
    %1033 = vmatpush1.bf16.msra.mxu0 %v1014
    %1034 = vmatprep.subr.bf16.mxu0 %v1017
    %1035 = vmatpush1.bf16.msra.mxu0 %v1016
    %1036 = vmatprep.subr.bf16.mxu0 0
    %1037 = vmatpush1.bf16.msra.mxu0 0
    %1038 = vmatprep.subr.bf16.mxu0 0
    %1039 = vmatpush1.bf16.msra.mxu0 0
    %1040 = vmatprep.subr.bf16.mxu0 0
    %1041 = vmatpush1.bf16.msra.mxu0 0
    %1042 = vmatprep.subr.bf16.mxu0 0
    %1043 = vmatpush1.bf16.msra.mxu0 0
    %1044 = vmatprep.subr.bf16.mxu0 0
    %1045 = vmatpush1.bf16.msra.mxu0 0
    %1046 = vmatprep.subr.bf16.mxu0 0
    %1047 = vmatpush1.bf16.msra.mxu0 0
    %1048 = vmatprep.subr.bf16.mxu0 0
    %1049 = vmatpush1.bf16.msra.mxu0 0
    %1050 = vmatprep.subr.bf16.mxu0 0
    %1051 = vmatpush1.bf16.msra.mxu0 0
    %1052 = vmatprep.subr.bf16.mxu0 0
    %1053 = vmatpush1.bf16.msra.mxu0 0
    %1054 = vmatprep.subr.bf16.mxu0 0
    %1055 = vmatpush1.bf16.msra.mxu0 0
    %1056 = vmatprep.subr.bf16.mxu0 0
    %1057 = vmatpush1.bf16.msra.mxu0 0
    %1058 = vmatprep.subr.bf16.mxu0 0
    %1059 = vmatpush1.bf16.msra.mxu0 0
    %1060 = vmatprep.mubr.bf16.mxu0 0
    %1061 = vmatmul.mubr.bf16.gmra.mrb[0].mxu0 %v1026
    %v1062 = vpop.f32.mrb[0].mxu0
    %v1063 = vadd.f32 0.0, %v1062
    %v1064 = vpop.f32.mrb[0].mxu0
    %v1065 = vadd.f32 0.0, %v1064
    %v1066 = vpop.f32.mrb[0].mxu0
    %v1067 = vpop.f32.mrb[0].mxu0
    %1068 = vdwg.mxu0
    %v1069 = vadd.f32 %v1065, %v222
    %v1070 = vmul.f32 %v1069, %v66
    %v1071 = vtanh.pop %v1070
    %v1072 = vmul.f32 %v1071, %v66
    %v1073 = vadd.f32 %v1072, %v67
    %v1074 = vmul.f32 %v1073, %v919
    %1076 = vrot.lane.b32.xlu0 %v1073, 64
    %v1077 = vpop.permute.xlu0 %1076
    %v1079 = vmul.f32 %v1073, %v1077
    %1081 = vrot.lane.b32.xlu0 %v1079, 32
    %v1082 = vpop.permute.xlu0 %1081
    %v1084 = vadd.f32 %v1074, %v1082
    %v1085 = vtanh.pop %v1084
    %1087 = vrot.lane.b32.xlu0 %v1085, 64
    %v1088 = vpop.permute.xlu0 %1087
    %v1090 = vmul.f32 %v1073, %v1088
    %s1091 = scalar_lea.vmem [#allocation9], 40
    %v1092 = vld [vmem:[%s1091] sm:$0xff]
    %v1093 = vadd.f32 %v1092, %v1063
    %v1094 = vmul.f32 %v1093, %v66
    %v1095 = vtanh.pop %v1094
    %v1096 = vmul.f32 %v1095, %v66
    %v1097 = vadd.f32 %v1096, %v67
    %v1098 = vmul.f32 %v1097, %v943
    %1100 = vrot.lane.b32.xlu0 %v1097, 64
    %v1101 = vpop.permute.xlu0 %1100
    %v1103 = vmul.f32 %v1097, %v1101
    %1105 = vrot.lane.b32.xlu0 %v1103, 32
    %v1106 = vpop.permute.xlu0 %1105
    %v1108 = vadd.f32 %v1098, %v1106
    %v1109 = vtanh.pop %v1108
    %1111 = vrot.lane.b32.xlu0 %v1109, 64
    %v1112 = vpop.permute.xlu0 %1111
    %v1114 = vmul.f32 %v1097, %v1112
    %p1115 = scmp.eq.s32.totalorder %s968, 7
    // Predicated region
    $region54: #{tpu_custom_call.1} parent=1 // pred_check
      %p1116 = pneg %p1115
    $region55: #{tpu_custom_call.1} parent=1 // pred_check_branch
      %1118 = sbr.rel (%p1116) target = $region57
    $region56: #{tpu_custom_call.1} parent=1 // pred_region
      %v1119 = vunpack.c.l.bf16 %v966
      %1121 = vrot.lane.b32.xlu0 %v1119, 32
      %v1122 = vpop.permute.xlu0 %1121
      %1124 = vst.msk [vmem:[#allocation13] sm:$0xff] %vm122, %v1122
      %1126 = vrot.lane.b32.xlu0 %v1090, 32
      %v1127 = vpop.permute.xlu0 %1126
      %s1129 = scalar_lea.vmem [#allocation13], 8
      %1130 = vst.msk [vmem:[%s1129] sm:$0xff] %vm122, %v1127
    $region57: #{tpu_custom_call.1} parent=1 // pred_fallthru
      _
    %v1131 = vpack.c.bf16 %v1114, %v1114
    %v1132 = vpack.c.bf16 %v1090, %v1090
    %s1133 = sadd.s32 %s112, 6
    %1135 = vrot.lane.b32.xlu0 %v1131, 32
    %v1136 = vpop.permute.xlu0 %1135
    %1138 = vrot.lane.b32.xlu0 %v1132, 64
    %v1139 = vpop.permute.xlu0 %1138
    %v1142 = vsel %vm122, %v1136, %v1139
    %v1143 = vld [vmem:[#allocation11] sm:$0xff]
    %v1144 = vld [vmem:[#allocation11 + $0x8] sm:$0xff]
    %v1145 = vld [vmem:[#allocation11 + $0x10] sm:$0xff]
    %v1146 = vld [vmem:[#allocation11 + $0x18] sm:$0xff]
    %v1147 = vld [vmem:[#allocation11 + $0x20] sm:$0xff]
    %v1148 = vld [vmem:[#allocation11 + $0x28] sm:$0xff]
    %v1149 = vld [vmem:[#allocation11 + $0x30] sm:$0xff]
    %v1150 = vld [vmem:[#allocation11 + $0x38] sm:$0xff]
    %v1159 = vunpack.c.l.b16 %v1143
    %v1160 = vunpack.c.h.b16 %v1143
    %v1161 = vunpack.c.l.b16 %v1144
    %v1162 = vunpack.c.h.b16 %v1144
    %v1163 = vunpack.c.l.b16 %v1145
    %v1164 = vunpack.c.h.b16 %v1145
    %v1165 = vunpack.c.l.b16 %v1146
    %v1166 = vunpack.c.h.b16 %v1146
    %v1167 = vunpack.c.l.b16 %v1147
    %v1168 = vunpack.c.h.b16 %v1147
    %v1169 = vunpack.c.l.b16 %v1148
    %v1170 = vunpack.c.h.b16 %v1148
    %v1171 = vunpack.c.l.b16 %v1149
    %v1172 = vunpack.c.h.b16 %v1149
    %v1173 = vunpack.c.l.b16 %v1150
    %v1174 = vunpack.c.h.b16 %v1150
    %v1175 = vpack.c.b16 %v1161, %v1159
    %v1176 = vpack.c.b16 %v1162, %v1160
    %v1177 = vpack.c.b16 %v1165, %v1163
    %v1178 = vpack.c.b16 %v1166, %v1164
    %v1179 = vpack.c.b16 %v1169, %v1167
    %v1180 = vpack.c.b16 %v1170, %v1168
    %v1181 = vpack.c.b16 %v1173, %v1171
    %v1182 = vpack.c.b16 %v1174, %v1172
    %v1191 = vsel %vm174, %v1142, 0
    %1193 = vmatprep.subr.bf16.mxu0 %v1176
    %1194 = vmatpush1.bf16.msra.mxu0 %v1175
    %1195 = vmatprep.subr.bf16.mxu0 %v1178
    %1196 = vmatpush1.bf16.msra.mxu0 %v1177
    %1197 = vmatprep.subr.bf16.mxu0 %v1180
    %1198 = vmatpush1.bf16.msra.mxu0 %v1179
    %1199 = vmatprep.subr.bf16.mxu0 %v1182
    %1200 = vmatpush1.bf16.msra.mxu0 %v1181
    %1201 = vmatprep.subr.bf16.mxu0 0
    %1202 = vmatpush1.bf16.msra.mxu0 0
    %1203 = vmatprep.subr.bf16.mxu0 0
    %1204 = vmatpush1.bf16.msra.mxu0 0
    %1205 = vmatprep.subr.bf16.mxu0 0
    %1206 = vmatpush1.bf16.msra.mxu0 0
    %1207 = vmatprep.subr.bf16.mxu0 0
    %1208 = vmatpush1.bf16.msra.mxu0 0
    %1209 = vmatprep.subr.bf16.mxu0 0
    %1210 = vmatpush1.bf16.msra.mxu0 0
    %1211 = vmatprep.subr.bf16.mxu0 0
    %1212 = vmatpush1.bf16.msra.mxu0 0
    %1213 = vmatprep.subr.bf16.mxu0 0
    %1214 = vmatpush1.bf16.msra.mxu0 0
    %1215 = vmatprep.subr.bf16.mxu0 0
    %1216 = vmatpush1.bf16.msra.mxu0 0
    %1217 = vmatprep.subr.bf16.mxu0 0
    %1218 = vmatpush1.bf16.msra.mxu0 0
    %1219 = vmatprep.subr.bf16.mxu0 0
    %1220 = vmatpush1.bf16.msra.mxu0 0
    %1221 = vmatprep.subr.bf16.mxu0 0
    %1222 = vmatpush1.bf16.msra.mxu0 0
    %1223 = vmatprep.subr.bf16.mxu0 0
    %1224 = vmatpush1.bf16.msra.mxu0 0
    %1225 = vmatprep.mubr.bf16.mxu0 0
    %1226 = vmatmul.mubr.bf16.gmra.mrb[0].mxu0 %v1191
    %v1227 = vpop.f32.mrb[0].mxu0
    %v1228 = vadd.f32 0.0, %v1227
    %v1229 = vpop.f32.mrb[0].mxu0
    %v1230 = vadd.f32 0.0, %v1229
    %v1231 = vpop.f32.mrb[0].mxu0
    %v1232 = vpop.f32.mrb[0].mxu0
    %1233 = vdwg.mxu0
    %v1234 = vadd.f32 %v1230, %v222
    %v1235 = vmul.f32 %v1234, %v66
    %v1236 = vtanh.pop %v1235
    %v1237 = vmul.f32 %v1236, %v66
    %v1238 = vadd.f32 %v1237, %v67
    %v1239 = vmul.f32 %v1238, %v1084
    %1241 = vrot.lane.b32.xlu0 %v1238, 64
    %v1242 = vpop.permute.xlu0 %1241
    %v1244 = vmul.f32 %v1238, %v1242
    %1246 = vrot.lane.b32.xlu0 %v1244, 32
    %v1247 = vpop.permute.xlu0 %1246
    %v1249 = vadd.f32 %v1239, %v1247
    %v1250 = vtanh.pop %v1249
    %1252 = vrot.lane.b32.xlu0 %v1250, 64
    %v1253 = vpop.permute.xlu0 %1252
    %v1255 = vmul.f32 %v1238, %v1253
    %s1256 = scalar_lea.vmem [#allocation9], 48
    %v1257 = vld [vmem:[%s1256] sm:$0xff]
    %v1258 = vadd.f32 %v1257, %v1228
    %v1259 = vmul.f32 %v1258, %v66
    %v1260 = vtanh.pop %v1259
    %v1261 = vmul.f32 %v1260, %v66
    %v1262 = vadd.f32 %v1261, %v67
    %v1263 = vmul.f32 %v1262, %v1108
    %1265 = vrot.lane.b32.xlu0 %v1262, 64
    %v1266 = vpop.permute.xlu0 %1265
    %v1268 = vmul.f32 %v1262, %v1266
    %1270 = vrot.lane.b32.xlu0 %v1268, 32
    %v1271 = vpop.permute.xlu0 %1270
    %v1273 = vadd.f32 %v1263, %v1271
    %v1274 = vtanh.pop %v1273
    %1276 = vrot.lane.b32.xlu0 %v1274, 64
    %v1277 = vpop.permute.xlu0 %1276
    %v1279 = vmul.f32 %v1262, %v1277
    %p1280 = scmp.eq.s32.totalorder %s1133, 7
    // Predicated region
    $region58: #{tpu_custom_call.1} parent=1 // pred_check
      %p1281 = pneg %p1280
    $region59: #{tpu_custom_call.1} parent=1 // pred_check_branch
      %1283 = sbr.rel (%p1281) target = $region61
    $region60: #{tpu_custom_call.1} parent=1 // pred_region
      %v1284 = vunpack.c.l.bf16 %v1131
      %1286 = vrot.lane.b32.xlu0 %v1284, 32
      %v1287 = vpop.permute.xlu0 %1286
      %1289 = vst.msk [vmem:[#allocation13] sm:$0xff] %vm122, %v1287
      %1291 = vrot.lane.b32.xlu0 %v1255, 32
      %v1292 = vpop.permute.xlu0 %1291
      %s1294 = scalar_lea.vmem [#allocation13], 8
      %1295 = vst.msk [vmem:[%s1294] sm:$0xff] %vm122, %v1292
    $region61: #{tpu_custom_call.1} parent=1 // pred_fallthru
      _
    %v1296 = vpack.c.bf16 %v1279, %v1279
    %v1297 = vpack.c.bf16 %v1255, %v1255
    %s1298 = sadd.s32 %s112, 7
    %1300 = vrot.lane.b32.xlu0 %v1296, 32
    %v1301 = vpop.permute.xlu0 %1300
    %1303 = vrot.lane.b32.xlu0 %v1297, 64
    %v1304 = vpop.permute.xlu0 %1303
    %v1307 = vsel %vm122, %v1301, %v1304
    %v1308 = vld [vmem:[#allocation11] sm:$0xff]
    %v1309 = vld [vmem:[#allocation11 + $0x8] sm:$0xff]
    %v1310 = vld [vmem:[#allocation11 + $0x10] sm:$0xff]
    %v1311 = vld [vmem:[#allocation11 + $0x18] sm:$0xff]
    %v1312 = vld [vmem:[#allocation11 + $0x20] sm:$0xff]
    %v1313 = vld [vmem:[#allocation11 + $0x28] sm:$0xff]
    %v1314 = vld [vmem:[#allocation11 + $0x30] sm:$0xff]
    %v1315 = vld [vmem:[#allocation11 + $0x38] sm:$0xff]
    %v1324 = vunpack.c.l.b16 %v1308
    %v1325 = vunpack.c.h.b16 %v1308
    %v1326 = vunpack.c.l.b16 %v1309
    %v1327 = vunpack.c.h.b16 %v1309
    %v1328 = vunpack.c.l.b16 %v1310
    %v1329 = vunpack.c.h.b16 %v1310
    %v1330 = vunpack.c.l.b16 %v1311
    %v1331 = vunpack.c.h.b16 %v1311
    %v1332 = vunpack.c.l.b16 %v1312
    %v1333 = vunpack.c.h.b16 %v1312
    %v1334 = vunpack.c.l.b16 %v1313
    %v1335 = vunpack.c.h.b16 %v1313
    %v1336 = vunpack.c.l.b16 %v1314
    %v1337 = vunpack.c.h.b16 %v1314
    %v1338 = vunpack.c.l.b16 %v1315
    %v1339 = vunpack.c.h.b16 %v1315
    %v1340 = vpack.c.b16 %v1326, %v1324
    %v1341 = vpack.c.b16 %v1327, %v1325
    %v1342 = vpack.c.b16 %v1330, %v1328
    %v1343 = vpack.c.b16 %v1331, %v1329
    %v1344 = vpack.c.b16 %v1334, %v1332
    %v1345 = vpack.c.b16 %v1335, %v1333
    %v1346 = vpack.c.b16 %v1338, %v1336
    %v1347 = vpack.c.b16 %v1339, %v1337
    %v1356 = vsel %vm174, %v1307, 0
    %1358 = vmatprep.subr.bf16.mxu0 %v1341
    %1359 = vmatpush1.bf16.msra.mxu0 %v1340
    %1360 = vmatprep.subr.bf16.mxu0 %v1343
    %1361 = vmatpush1.bf16.msra.mxu0 %v1342
    %1362 = vmatprep.subr.bf16.mxu0 %v1345
    %1363 = vmatpush1.bf16.msra.mxu0 %v1344
    %1364 = vmatprep.subr.bf16.mxu0 %v1347
    %1365 = vmatpush1.bf16.msra.mxu0 %v1346
    %1366 = vmatprep.subr.bf16.mxu0 0
    %1367 = vmatpush1.bf16.msra.mxu0 0
    %1368 = vmatprep.subr.bf16.mxu0 0
    %1369 = vmatpush1.bf16.msra.mxu0 0
    %1370 = vmatprep.subr.bf16.mxu0 0
    %1371 = vmatpush1.bf16.msra.mxu0 0
    %1372 = vmatprep.subr.bf16.mxu0 0
    %1373 = vmatpush1.bf16.msra.mxu0 0
    %1374 = vmatprep.subr.bf16.mxu0 0
    %1375 = vmatpush1.bf16.msra.mxu0 0
    %1376 = vmatprep.subr.bf16.mxu0 0
    %1377 = vmatpush1.bf16.msra.mxu0 0
    %1378 = vmatprep.subr.bf16.mxu0 0
    %1379 = vmatpush1.bf16.msra.mxu0 0
    %1380 = vmatprep.subr.bf16.mxu0 0
    %1381 = vmatpush1.bf16.msra.mxu0 0
    %1382 = vmatprep.subr.bf16.mxu0 0
    %1383 = vmatpush1.bf16.msra.mxu0 0
    %1384 = vmatprep.subr.bf16.mxu0 0
    %1385 = vmatpush1.bf16.msra.mxu0 0
    %1386 = vmatprep.subr.bf16.mxu0 0
    %1387 = vmatpush1.bf16.msra.mxu0 0
    %1388 = vmatprep.subr.bf16.mxu0 0
    %1389 = vmatpush1.bf16.msra.mxu0 0
    %1390 = vmatprep.mubr.bf16.mxu0 0
    %1391 = vmatmul.mubr.bf16.gmra.mrb[0].mxu0 %v1356
    %v1392 = vpop.f32.mrb[0].mxu0
    %v1393 = vadd.f32 0.0, %v1392
    %v1394 = vpop.f32.mrb[0].mxu0
    %v1395 = vadd.f32 0.0, %v1394
    %v1396 = vpop.f32.mrb[0].mxu0
    %v1397 = vpop.f32.mrb[0].mxu0
    %1398 = vdwg.mxu0
    %v1399 = vadd.f32 %v1395, %v222
    %v1400 = vmul.f32 %v1399, %v66
    %v1401 = vtanh.pop %v1400
    %v1402 = vmul.f32 %v1401, %v66
    %v1403 = vadd.f32 %v1402, %v67
    %v1404 = vmul.f32 %v1403, %v1249
    %1406 = vrot.lane.b32.xlu0 %v1403, 64
    %v1407 = vpop.permute.xlu0 %1406
    %v1409 = vmul.f32 %v1403, %v1407
    %1411 = vrot.lane.b32.xlu0 %v1409, 32
    %v1412 = vpop.permute.xlu0 %1411
    %v1414 = vadd.f32 %v1404, %v1412
    %v1415 = vtanh.pop %v1414
    %1417 = vrot.lane.b32.xlu0 %v1415, 64
    %v1418 = vpop.permute.xlu0 %1417
    %v1420 = vmul.f32 %v1403, %v1418
    %s1421 = scalar_lea.vmem [#allocation9], 56
    %v1422 = vld [vmem:[%s1421] sm:$0xff]
    %v1423 = vadd.f32 %v1422, %v1393
    %v1424 = vmul.f32 %v1423, %v66
    %v1425 = vtanh.pop %v1424
    %v1426 = vmul.f32 %v1425, %v66
    %v1427 = vadd.f32 %v1426, %v67
    %v1428 = vmul.f32 %v1427, %v1273
    %1430 = vrot.lane.b32.xlu0 %v1427, 64
    %v1431 = vpop.permute.xlu0 %1430
    %v1433 = vmul.f32 %v1427, %v1431
    %1435 = vrot.lane.b32.xlu0 %v1433, 32
    %v1436 = vpop.permute.xlu0 %1435
    %v1438 = vadd.f32 %v1428, %v1436
    %v1439 = vtanh.pop %v1438
    %1441 = vrot.lane.b32.xlu0 %v1439, 64
    %v1442 = vpop.permute.xlu0 %1441
    %v1444 = vmul.f32 %v1427, %v1442
    %p1445 = scmp.eq.s32.totalorder %s1298, 7
    // Predicated region
    $region62: #{tpu_custom_call.1} parent=1 // pred_check
      %p1446 = pneg %p1445
    $region63: #{tpu_custom_call.1} parent=1 // pred_check_branch
      %1448 = sbr.rel (%p1446) target = $region65
    $region64: #{tpu_custom_call.1} parent=1 // pred_region
      %v1449 = vunpack.c.l.bf16 %v1296
      %1451 = vrot.lane.b32.xlu0 %v1449, 32
      %v1452 = vpop.permute.xlu0 %1451
      %1454 = vst.msk [vmem:[#allocation13] sm:$0xff] %vm122, %v1452
      %1456 = vrot.lane.b32.xlu0 %v1420, 32
      %v1457 = vpop.permute.xlu0 %1456
      %s1459 = scalar_lea.vmem [#allocation13], 8
      %1460 = vst.msk [vmem:[%s1459] sm:$0xff] %vm122, %v1457
    $region65: #{tpu_custom_call.1} parent=1 // pred_fallthru
      _
    %v1461 = vpack.c.bf16 %v1444, %v1444
    %v1462 = vpack.c.bf16 %v1420, %v1420
    %1464 = vrot.lane.b32.xlu0 %v925, 32
    %v1465 = vpop.permute.xlu0 %1464
    %1468 = vrot.lane.b32.xlu0 %v1090, 64
    %v1469 = vpop.permute.xlu0 %1468
    %1472 = vrot.lane.b32.xlu0 %v1255, 96
    %v1473 = vpop.permute.xlu0 %1472
    %v1475 = vsel %vm122, %v1465, %v1469
    %v1476 = vsel %vm174, %v1475, %v1473
    %v1477 = vsel %vm800, %v1476, %v1420
    %s1478 = scalar_lea.vmem [#allocation12], 8
    %1479 = vst [vmem:[%s1478] sm:$0xff] %v1477
    %v1481 = vunpack.c.l.b16 %v1461
    %v1482 = vpack.c.b16 %v1481, %v1481
    %1483 = vrot.lane.b32.xlu0 %v1482, 32
    %v1484 = vpop.permute.xlu0 %1483
    %vm1486 = vcmask 257024
    %1487 = vst.msk [vmem:[#allocation2] sm:$0xf] %vm1486, %v1484
    %1489 = vrot.lane.b32.xlu0 %v1438, 96
    %v1490 = vpop.permute.xlu0 %1489
    %1492 = vst.msk [vmem:[#allocation3] sm:$0xff] %vm122, %v1490
    %v1494 = vunpack.c.l.b16 %v1462
    %v1495 = vpack.c.b16 %v1494, %v1494
    %1496 = vrot.lane.b32.xlu0 %v1495, 32
    %v1497 = vpop.permute.xlu0 %1496
    %1499 = vst.msk [vmem:[#allocation4] sm:$0xf] %vm1486, %v1497
    %1501 = vrot.lane.b32.xlu0 %v1414, 96
    %v1502 = vpop.permute.xlu0 %1501
    %1504 = vst.msk [vmem:[#allocation5] sm:$0xff] %vm122, %v1502
    // Predicated region
    $region66: #{tpu_custom_call.1} parent=1 // pred_check
      _
    $region67: #{tpu_custom_call.1} parent=1 // pred_check_branch
      %1506 = sbr.rel (0) target = $region69
    $region68: #{tpu_custom_call.1} parent=1 // pred_region
      %s1508 = ssub.s32 256, 256
      %1509 = vsyncadd [#allocation8], %s1508
      %s1510 = sshll.u32 [#allocation12], 4
      %s1511 = int_to_ptr.vmem [resolvable:$true] %s1510
      %1516 = dma.vmem_to_hbm [thread:$0]  %s1511, 256, %s4, [#allocation8], 128, 128, 8
    $region69: #{tpu_custom_call.1} parent=1 // pred_fallthru
      _
    // Predicated region
    $region70: #{tpu_custom_call.1} parent=1 // pred_check
      _
    $region71: #{tpu_custom_call.1} parent=1 // pred_check_branch
      %1518 = sbr.rel (0) target = $region73
    $region72: #{tpu_custom_call.1} parent=1 // pred_region
      %s1520 = ssub.s32 256, 256
      %1521 = vsyncadd [#allocation14], %s1520
      %s1522 = sshll.u32 [#allocation13], 4
      %s1523 = int_to_ptr.vmem [resolvable:$true] %s1522
      %1528 = dma.vmem_to_hbm [thread:$0]  %s1523, 256, %s5, [#allocation14], 128, 128, 8
    $region73: #{tpu_custom_call.1} parent=1 // pred_fallthru
      _
    // Predicated region
    $region74: #{tpu_custom_call.1} parent=1 // pred_check
      _
    $region75: #{tpu_custom_call.1} parent=1 // pred_check_branch
      %1530 = sbr.rel (0) target = $region77
    $region76: #{tpu_custom_call.1} parent=1 // pred_region
      %1531 = dma.done [#allocation8], 256
    $region77: #{tpu_custom_call.1} parent=1 // pred_fallthru
      _
    // Predicated region
    $region78: #{tpu_custom_call.1} parent=1 // pred_check
      _
    $region79: #{tpu_custom_call.1} parent=1 // pred_check_branch
      %1533 = sbr.rel (0) target = $region81
    $region80: #{tpu_custom_call.1} parent=1 // pred_region
      %1534 = dma.done [#allocation14], 256
    $region81: #{tpu_custom_call.1} parent=1 // pred_fallthru
      _
    %1535 = vsyncpa [#allocation7], 1
    %1536 = vsyncpa [#allocation10], 1
    %1537 = vsyncpa [#allocation8], 1
    %1538 = vsyncpa [#allocation14], 1

</llo_original>
